<compile_context>
chip_gen: v5e
topology: v5e:2x2
jax: 0.10.0
libtpu: 0.0.40
codegen_flags: <defaults>
</compile_context>

<pallas_src>
import functools
import math

import jax
import jax.numpy as jnp
from jax.experimental import pallas as pl
from jax.experimental.pallas import tpu as pltpu


def _round_up(x: int, m: int) -> int:
    return ((x + m - 1) // m) * m


def _pe_kernel(base_ref, inv_freq_ref, o_ref, *, pos_per_row, row_block):
    """Fill one (row_block, width) tile of the packed PE table.

    Packed layout: lane l of global row r holds
        pe[r * pos_per_row + l // d_model, 0, l % d_model]
    where pe[p, 0, j] = sin(p * inv_freq(j//2) + (pi/2 if j odd else 0)).
    All lane-only setup arrives precomputed in base_ref / inv_freq_ref
    ((1, width) each), so the body is: broadcast mul + add + one sin/element.
    """
    i = pl.program_id(0)
    rows = o_ref.shape[0]
    row = jax.lax.broadcasted_iota(jnp.int32, (rows, 1), 0)
    pos_row = ((i * row_block + row) * pos_per_row).astype(jnp.float32)
    angle = pos_row * inv_freq_ref[...] + base_ref[...]        # (rows, width)
    o_ref[...] = jnp.sin(angle)


@functools.lru_cache(maxsize=None)
def _pe_table(d_model: int, max_len: int):
    """Build the cached (1, max_len, d_model) f32 table once per shape."""
    assert d_model % 2 == 0, "torch module requires even d_model"

    # Lane packing: width = pos_per_row * d_model is a multiple of 128
    # (lane-dense unmasked stores) whenever lcm(d_model, 128) is reasonable.
    lcm = d_model * 128 // math.gcd(d_model, 128)
    pos_per_row = lcm // d_model if lcm <= 4096 else 1
    width = pos_per_row * d_model

    rows_needed = pl.cdiv(max_len, pos_per_row)

    # Block/grid selection:
    #  * one block <= ~4 MiB (output double-buffered -> ~8 MiB; fits v5e's
    #    16 MiB scoped VMEM, more headroom on v6e/v7x),
    #  * >= 2 parallel steps whenever rows_needed > 8 so v7x megacore splits
    #    the EUP-bound work,
    #  * blocks balanced so row padding stays small (no whole-block overshoot).
    max_block_rows = max(8, (4 * 1024 * 1024) // (width * 4))
    num_blocks = pl.cdiv(rows_needed, max_block_rows)
    if rows_needed > 8:
        num_blocks = max(num_blocks, 2)
    row_block = _round_up(pl.cdiv(rows_needed, num_blocks), 8)
    rows_total = _round_up(rows_needed, row_block)
    grid = (rows_total // row_block,)

    # Lane-only setup, hoisted out of the per-grid-step body: (1, width) rows.
    lane = jnp.arange(width, dtype=jnp.int32)
    feat = lane % d_model                                     # feature index j
    inv_freq = jnp.exp((feat // 2).astype(jnp.float32)
                       * jnp.float32(-2.0 * math.log(10000.0) / d_model))
    phase = (feat % 2).astype(jnp.float32) * jnp.float32(math.pi / 2.0)
    base = (lane // d_model).astype(jnp.float32) * inv_freq + phase
    inv_freq = inv_freq.reshape(1, width)
    base = base.reshape(1, width)

    packed = pl.pallas_call(
        functools.partial(_pe_kernel, pos_per_row=pos_per_row,
                          row_block=row_block),
        out_shape=jax.ShapeDtypeStruct((rows_total, width), jnp.float32),
        grid=grid,
        in_specs=[pl.BlockSpec((1, width), lambda i: (0, 0)),
                  pl.BlockSpec((1, width), lambda i: (0, 0))],
        out_specs=pl.BlockSpec((row_block, width), lambda i: (i, 0)),
        compiler_params=pltpu.CompilerParams(
            dimension_semantics=("parallel",)),
    )(base, inv_freq)

    # Un-pack (pure layout), drop padding rows, pre-shape to the forward-pass
    # output layout so the per-step path is a single slice.
    pe = packed.reshape(rows_total * pos_per_row, d_model)[:max_len]
    return pe.reshape(1, max_len, d_model)


def positional_encoding_forward(x, d_model, dropout_p: float = 0.1,
                                max_len: int = 1000):
    """Forward pass of PositionalEncoding.

    x: [seq_len, batch, d_model] -> [1, min(batch, max_len), d_model] float32.
    Mirrors the torch quirk: the table is sliced by x.size(1) (the batch dim)
    and x's values are never read.
    """
    seq_len, batch, dm = x.shape
    assert dm == d_model

    pe = _pe_table(d_model, max_len)          # cached; kernel runs once/shape
    n = min(batch, max_len)                   # torch silently truncates
    # TODO(synk): train-mode dropout (torch RNG stream) not replicated;
    # eval-mode identity only. Could emulate statistically with
    # pltpu.prng_seed + pltpu.prng_random_bits if needed.
    return jax.lax.slice_in_dim(pe, 0, n, axis=1)   # [1, n, d_model]


def _reference(x, d_model, max_len: int = 1000):
    """Pure-JAX reference mirroring the torch buffer construction."""
    position = jnp.arange(max_len, dtype=jnp.float32)[:, None]
    div_term = jnp.exp(jnp.arange(0, d_model, 2, dtype=jnp.float32)
                       * (-math.log(10000.0) / d_model))
    pe = jnp.zeros((max_len, 1, d_model), dtype=jnp.float32)
    pe = pe.at[:, 0, 0::2].set(jnp.sin(position * div_term))
    pe = pe.at[:, 0, 1::2].set(jnp.cos(position * div_term))
    pos = pe[: min(x.shape[1], max_len)]            # [n, 1, d_model]
    return jnp.transpose(pos, (1, 0, 2))            # [1, n, d_model]


if __name__ == "__main__":
    key = jax.random.PRNGKey(0)
    seq_len, batch, d_model = 8, 4, 32
    x = jax.random.normal(key, (seq_len, batch, d_model), dtype=jnp.float32)

    out = jax.block_until_ready(positional_encoding_forward(x, d_model))
    ref = _reference(x, d_model)
    assert out.shape == (1, batch, d_model), out.shape
    assert jnp.allclose(out, ref, atol=1e-5, rtol=1e-5), "mismatch vs reference"

    # Second forward hits the cache (no new pallas_call).
    out2 = jax.block_until_ready(positional_encoding_forward(x, d_model))
    assert jnp.array_equal(out, out2)

    # Exercise the lcm lane-packing path (d_model=96 -> width 384) and the
    # second grid block (positions >= 512). Tight tol at small positions;
    # loose at large positions (f32 sin range-reduction / angle-decomposition
    # drift only) -- still catches any layout / index_map bug.
    d96 = 96
    pe96 = jax.block_until_ready(_pe_table(d96, 1000))
    ref96 = _reference(jnp.zeros((1, 1000, d96), jnp.float32), d96, max_len=1000)
    assert pe96.shape == (1, 1000, d96), pe96.shape
    assert jnp.allclose(pe96[:, :64], ref96[:, :64], atol=1e-5, rtol=1e-5)
    assert jnp.allclose(pe96[:, 512:], ref96[:, 512:], atol=2e-3, rtol=2e-3)

    print("KERNEL_OK")
</pallas_src>

<mosaic_0001>
module attributes {stable_mosaic.version = 11 : i64} {
  func.func @_pe_kernel(%arg0: i32, %arg1: memref<1x128xf32, #tpu.memory_space<vmem>>, %arg2: memref<1x128xf32, #tpu.memory_space<vmem>>, %arg3: memref<128x128xf32, #tpu.memory_space<vmem>>) attributes {dimension_semantics = [#tpu.dimension_semantics<parallel>], iteration_bounds = array<i64: 2>, scalar_prefetch = 0 : i64, scratch_operands = 0 : i64, tpu.core_type = #tpu.core_type<tc>, window_params = [{pipeline_mode = #tpu.pipeline_mode<synchronous>, transform_indices = @transform_0, window_bounds = array<i64: 1, 128>}, {pipeline_mode = #tpu.pipeline_mode<synchronous>, transform_indices = @transform_1, window_bounds = array<i64: 1, 128>}, {transform_indices = @transform_2, window_bounds = array<i64: 128, 128>}]} {
    %0 = tpu.iota {dimensions = array<i32: 0>} : vector<128x1xi32>
    %c128_i32 = arith.constant 128 : i32
    %1 = arith.muli %arg0, %c128_i32 : i32
    %2 = vector.broadcast %1 : i32 to vector<128x1xi32>
    %3 = arith.addi %2, %0 : vector<128x1xi32>
    %c4_i32 = arith.constant 4 : i32
    %4 = vector.broadcast %c4_i32 : i32 to vector<128x1xi32>
    %5 = arith.muli %3, %4 : vector<128x1xi32>
    %6 = arith.sitofp %5 : vector<128x1xi32> to vector<128x1xf32>
    %c0 = arith.constant 0 : index
    %c0_0 = arith.constant 0 : index
    %7 = vector.load %arg2[%c0, %c0_0] : memref<1x128xf32, #tpu.memory_space<vmem>>, vector<1x128xf32>
    %8 = vector.broadcast %6 : vector<128x1xf32> to vector<128x128xf32>
    %9 = vector.broadcast %7 : vector<1x128xf32> to vector<128x128xf32>
    %10 = arith.mulf %8, %9 : vector<128x128xf32>
    %c0_1 = arith.constant 0 : index
    %c0_2 = arith.constant 0 : index
    %11 = vector.load %arg1[%c0_1, %c0_2] : memref<1x128xf32, #tpu.memory_space<vmem>>, vector<1x128xf32>
    %12 = vector.broadcast %11 : vector<1x128xf32> to vector<128x128xf32>
    %13 = arith.addf %10, %12 : vector<128x128xf32>
    %14 = math.sin %13 : vector<128x128xf32>
    %c0_3 = arith.constant 0 : index
    %c0_4 = arith.constant 0 : index
    %15 = vector.load %arg3[%c0_3, %c0_4] : memref<128x128xf32, #tpu.memory_space<vmem>>, vector<128x128xf32>
    tpu.vector_store %arg3[%c0_3, %c0_4], %14 {strides = array<i32>} : memref<128x128xf32, #tpu.memory_space<vmem>>, vector<128x128xf32>,
    return
  }
  func.func @transform_0(%arg0: i32) -> (i32, i32) {
    %c0_i32 = arith.constant 0 : i32
    %c0_i32_0 = arith.constant 0 : i32
    %c0_i32_1 = arith.constant 0 : i32
    return %c0_i32, %c0_i32_0 : i32, i32
  }
  func.func @transform_1(%arg0: i32) -> (i32, i32) {
    %c0_i32 = arith.constant 0 : i32
    %c0_i32_0 = arith.constant 0 : i32
    %c0_i32_1 = arith.constant 0 : i32
    return %c0_i32, %c0_i32_0 : i32, i32
  }
  func.func @transform_2(%arg0: i32) -> (i32, i32) {
    %c0_i32 = arith.constant 0 : i32
    %c0_i32_0 = arith.constant 0 : i32
    return %arg0, %c0_i32 : i32, i32
  }
}

</mosaic_0001>

<llo_original>
// kernel: tpu_custom_call.1
$region0: #{tpu_custom_call.1}
  #allocation0 [shape = 'u32[]', space=smem, size = 0x4, offset = 0x4, fixed_abs, tag = 'smem constant byte address 0x4 - core index']
  #allocation1 [shape = 'u32[72,128]{1,0:T(1,128)}', space=vmem, size = 0x9000, scoped, tag = 'internal scratch']
  %s0 = inlined_call_operand.hbm [shape: f32[1,128], index: 0, kind: input, shape index: {}]
  %s1 = inlined_call_operand.hbm [shape: f32[1,128], index: 1, kind: input, shape index: {}]
  %s2 = inlined_call_operand.hbm [shape: f32[256,128], index: 2, kind: output, shape index: {}]
  %s3 = sld [smem:[#allocation0]]
  $region49: #{tpu_custom_call.1} parent=0
    _
  %s5 = ssub.s32 1, %s3
  %s6 = scalar_select 0, %s5, %s3
  $region1: #{tpu_custom_call.1} parent=0
    #allocation2 [shape = 'u8[512]{0}', space=vmem, size = 0x400, scoped, tag = 'input window, operand 0, single buffered']
    #allocation3 [shape = 's32[2]{0}', space=sflag, size = 0x8, scoped, tag = 'scoped memory for tpu_custom_call.1']
    #allocation4 [shape = 's32[2]{0}', space=sflag, size = 0x8, scoped, tag = 'scoped memory for tpu_custom_call.1']
    #allocation5 [shape = 'u8[512]{0}', space=vmem, size = 0x400, scoped, tag = 'input window, operand 1, single buffered']
    #allocation6 [shape = 's32[1]{0}', space=sflag, size = 0x4, scoped, tag = 'scoped memory for tpu_custom_call.1']
    #allocation7 [shape = 'u8[131072]{0}', space=vmem, size = 0x20000, scoped, tag = 'output window, operand 0']
    %7 = vsyncpa [#allocation3], 0
    %8 = vsyncpa [#allocation6], 0
    %9 = vsyncpa [#allocation4], 0
    %s10 = scalar_lea.sflag [#allocation4], 1
    %11 = vsyncpa %s10, 0
    loop: start=0, step=1, limit=4
    $region2: #{tpu_custom_call.1} parent=1 // loop_pre_header
      _
    $region3: #{tpu_custom_call.1} parent=1 // loop_header
      %s13 = sphi 0, %s17
      %p14 = scmp.ge.s32.totalorder %s13, 4
      %s21 = sphi 0, %s21
      %s23 = sphi 0, %s21
      %s24 = sphi 0, %s23
      %s38 = sphi 0, %s24
      %s42 = sphi 0, %s42
      %s44 = sphi 0, %s42
      %s45 = sphi 0, %s44
      %s59 = sphi 0, %s45
      %s65 = sphi 0, %s67
      %s68 = sphi 0, %s65
      %s69 = sphi 0, %s68
      %s85 = sphi 0, %s69
    $region4: #{tpu_custom_call.1} parent=1 // loop_header_branch
      %16 = sbr.rel (%p14) target = $region8
    $region5: #{tpu_custom_call.1} parent=1 // loop_body
      %s18 = ssub.s32 %s13, 1
      %s19 = ssub.s32 %s13, 2
      %s20 = sadd.s32 %s13, 1
      %s22 = sadd.s32 %s21, 1
      %p25 = scmp.eq.s32.totalorder %s13, 1
      %p26 = scmp.ne.s32.totalorder %s21, %s23
      %p27 = scmp.eq.s32.totalorder %s13, 0
      %p28 = por %p26, %p27
      %p29 = scmp.ne.s32.totalorder %s21, %s23
      %p30 = scmp.eq.s32.totalorder %s18, 1
      %p31 = por %p29, %p30
      %p32 = scmp.ne.s32.totalorder %s23, %s24
      %p33 = scmp.eq.s32.totalorder %s18, 0
      %p34 = por %p32, %p33
      %p35 = scmp.ne.s32.totalorder %s23, %s24
      %p36 = scmp.eq.s32.totalorder %s19, 1
      %p37 = por %p35, %p36
      %p39 = scmp.ne.s32.totalorder %s24, %s38
      %p40 = scmp.eq.s32.totalorder %s19, 0
      %p41 = por %p39, %p40
      %s43 = sadd.s32 %s42, 1
      %p46 = scmp.eq.s32.totalorder %s13, 1
      %p47 = scmp.ne.s32.totalorder %s42, %s44
      %p48 = scmp.eq.s32.totalorder %s13, 0
      %p49 = por %p47, %p48
      %p50 = scmp.ne.s32.totalorder %s42, %s44
      %p51 = scmp.eq.s32.totalorder %s18, 1
      %p52 = por %p50, %p51
      %p53 = scmp.ne.s32.totalorder %s44, %s45
      %p54 = scmp.eq.s32.totalorder %s18, 0
      %p55 = por %p53, %p54
      %p56 = scmp.ne.s32.totalorder %s44, %s45
      %p57 = scmp.eq.s32.totalorder %s19, 1
      %p58 = por %p56, %p57
      %p60 = scmp.ne.s32.totalorder %s45, %s59
      %p61 = scmp.eq.s32.totalorder %s19, 0
      %p62 = por %p60, %p61
      %s63 = ssub.s32 %s13, %s20
      %p64 = scmp.eq.s32.totalorder %s63, 0
      %s66 = sadd.s32 %s65, 1
      %s67 = scalar_select %p64, %s65, %s66
      %p70 = pneg %p64
      %p71 = scmp.eq.s32.totalorder %s13, 1
      %p72 = por %p70, %p71
      %p73 = scmp.ne.s32.totalorder %s65, %s68
      %p74 = scmp.eq.s32.totalorder %s13, 0
      %p75 = por %p73, %p74
      %p76 = scmp.ne.s32.totalorder %s65, %s68
      %p77 = scmp.eq.s32.totalorder %s18, 1
      %p78 = por %p76, %p77
      %p79 = scmp.ne.s32.totalorder %s68, %s69
      %p80 = scmp.eq.s32.totalorder %s18, 0
      %p81 = por %p79, %p80
      %p82 = scmp.ne.s32.totalorder %s68, %s69
      %p83 = scmp.eq.s32.totalorder %s19, 1
      %p84 = por %p82, %p83
      %p86 = scmp.ne.s32.totalorder %s69, %s85
      %p87 = scmp.eq.s32.totalorder %s19, 0
      %p88 = por %p86, %p87
      %p89 = scmp.le.s32.totalorder 1, %s13
      %p90 = scmp.lt.s32.totalorder %s13, 3
      %p91 = pnand %p89, %p90
      %p92 = pneg %p91
      // Predicated region
      $region9: #{tpu_custom_call.1} parent=5 // pred_check
        _
      $region10: #{tpu_custom_call.1} parent=5 // pred_check_branch
        %94 = sbr.rel (%p91) target = $region12
      $region11: #{tpu_custom_call.1} parent=5 // pred_region
        %s95 = ssub.s32 %s13, 1
        // Predicated region
        $region13: #{tpu_custom_call.1} parent=11 // pred_check
          %p96 = pneg %p34
        $region14: #{tpu_custom_call.1} parent=11 // pred_check_branch
          %98 = sbr.rel (%p96) target = $region16
        $region15: #{tpu_custom_call.1} parent=11 // pred_region
          %100 = vsyncadd [#allocation3], 0
          %s102 = sshll.u32 %s0, 4
          %s103 = int_to_ptr.hbm [resolvable:$true] %s102
          %s104 = sshll.u32 [#allocation2], 4
          %s105 = int_to_ptr.vmem [resolvable:$true] %s104
          %107 = dma.hbm_to_vmem [thread:$0]  %s103, 16, %s105, [#allocation3]
        $region16: #{tpu_custom_call.1} parent=11 // pred_fallthru
          _
        // Predicated region
        $region17: #{tpu_custom_call.1} parent=11 // pred_check
          %p108 = pneg %p55
        $region18: #{tpu_custom_call.1} parent=11 // pred_check_branch
          %110 = sbr.rel (%p108) target = $region20
        $region19: #{tpu_custom_call.1} parent=11 // pred_region
          %112 = vsyncadd [#allocation6], 0
          %s114 = sshll.u32 %s1, 4
          %s115 = int_to_ptr.hbm [resolvable:$true] %s114
          %s116 = sshll.u32 [#allocation5], 4
          %s117 = int_to_ptr.vmem [resolvable:$true] %s116
          %119 = dma.hbm_to_vmem [thread:$0]  %s115, 16, %s117, [#allocation6]
        $region20: #{tpu_custom_call.1} parent=11 // pred_fallthru
          _
      $region12: #{tpu_custom_call.1} parent=5 // pred_fallthru
        _
      %p120 = scmp.lt.s32.totalorder %s13, 2
      // Predicated region
      $region21: #{tpu_custom_call.1} parent=5 // pred_check
        %p121 = pneg %p120
      $region22: #{tpu_custom_call.1} parent=5 // pred_check_branch
        %123 = sbr.rel (%p121) target = $region24
      $region23: #{tpu_custom_call.1} parent=5 // pred_region
        _
      $region24: #{tpu_custom_call.1} parent=5 // pred_fallthru
        _
      %p124 = scmp.le.s32.totalorder 1, %s13
      %p125 = scmp.lt.s32.totalorder %s13, 3
      %p126 = pnand %p124, %p125
      %p127 = pneg %p126
      // Predicated region
      $region25: #{tpu_custom_call.1} parent=5 // pred_check
        _
      $region26: #{tpu_custom_call.1} parent=5 // pred_check_branch
        %129 = sbr.rel (%p126) target = $region28
      $region27: #{tpu_custom_call.1} parent=5 // pred_region
        %s130 = ssub.s32 %s13, 1
        // Predicated region
        $region29: #{tpu_custom_call.1} parent=27 // pred_check
          %p131 = pneg %p34
        $region30: #{tpu_custom_call.1} parent=27 // pred_check_branch
          %133 = sbr.rel (%p131) target = $region32
        $region31: #{tpu_custom_call.1} parent=27 // pred_region
          %135 = dma.done [#allocation3], 16
        $region32: #{tpu_custom_call.1} parent=27 // pred_fallthru
          _
        // Predicated region
        $region33: #{tpu_custom_call.1} parent=27 // pred_check
          %p136 = pneg %p55
        $region34: #{tpu_custom_call.1} parent=27 // pred_check_branch
          %138 = sbr.rel (%p136) target = $region36
        $region35: #{tpu_custom_call.1} parent=27 // pred_region
          %140 = dma.done [#allocation6], 16
        $region36: #{tpu_custom_call.1} parent=27 // pred_fallthru
          _
        %p141 = pneg %p34
        %p142 = pneg %p31
        %p143 = pneg %p55
        %p144 = pneg %p52
        %p145 = pneg %p81
        %p146 = pneg %p78
        %s147 = sand.u32 %s68, 1
        %s148 = scalar_lea.sflag [#allocation4], %s147
        %s149 = sand.u32 %s68, 1
        %s150 = smul.addr %s149, 128
        %s151 = scalar_lea.vmem [#allocation7], %s150
        %s152 = smul.u32 16, %s18
        %v153 = vlaneseq
        %v154 = vshrl.u32 %v153, 7
        %v155 = vadd.s32 %v154, 8
        %v156 = vadd.s32 %v154, 16
        %v157 = vadd.s32 %v154, 24
        %v158 = vadd.s32 %v154, 32
        %v159 = vadd.s32 %v154, 40
        %v160 = vadd.s32 %v154, 48
        %v161 = vadd.s32 %v154, 56
        %v162 = vadd.s32 %v154, 64
        %v163 = vadd.s32 %v154, 72
        %v164 = vadd.s32 %v154, 80
        %v165 = vadd.s32 %v154, 88
        %v166 = vadd.s32 %v154, 96
        %v167 = vadd.s32 %v154, 104
        %v168 = vadd.s32 %v154, 112
        %v169 = vadd.s32 %v154, 120
        %s170 = smul.u32 %s18, 128
        %v171 = vstv %s170
        %v172 = vadd.s32 %v171, %v154
        %v173 = vadd.s32 %v171, %v155
        %v174 = vadd.s32 %v171, %v156
        %v175 = vadd.s32 %v171, %v157
        %v176 = vadd.s32 %v171, %v158
        %v177 = vadd.s32 %v171, %v159
        %v178 = vadd.s32 %v171, %v160
        %v179 = vadd.s32 %v171, %v161
        %v180 = vadd.s32 %v171, %v162
        %v181 = vadd.s32 %v171, %v163
        %v182 = vadd.s32 %v171, %v164
        %v183 = vadd.s32 %v171, %v165
        %v184 = vadd.s32 %v171, %v166
        %v185 = vadd.s32 %v171, %v167
        %v186 = vadd.s32 %v171, %v168
        %v187 = vadd.s32 %v171, %v169
        %v188 = vmul.u32 %v172, 4
        %v189 = vmul.u32 %v173, 4
        %v190 = vmul.u32 %v174, 4
        %v191 = vmul.u32 %v175, 4
        %v192 = vmul.u32 %v176, 4
        %v193 = vmul.u32 %v177, 4
        %v194 = vmul.u32 %v178, 4
        %v195 = vmul.u32 %v179, 4
        %v196 = vmul.u32 %v180, 4
        %v197 = vmul.u32 %v181, 4
        %v198 = vmul.u32 %v182, 4
        %v199 = vmul.u32 %v183, 4
        %v200 = vmul.u32 %v184, 4
        %v201 = vmul.u32 %v185, 4
        %v202 = vmul.u32 %v186, 4
        %v203 = vmul.u32 %v187, 4
        %v204 = vcvt.s32.f32 %v188
        %v205 = vcvt.s32.f32 %v189
        %v206 = vcvt.s32.f32 %v190
        %v207 = vcvt.s32.f32 %v191
        %v208 = vcvt.s32.f32 %v192
        %v209 = vcvt.s32.f32 %v193
        %v210 = vcvt.s32.f32 %v194
        %v211 = vcvt.s32.f32 %v195
        %v212 = vcvt.s32.f32 %v196
        %v213 = vcvt.s32.f32 %v197
        %v214 = vcvt.s32.f32 %v198
        %v215 = vcvt.s32.f32 %v199
        %v216 = vcvt.s32.f32 %v200
        %v217 = vcvt.s32.f32 %v201
        %v218 = vcvt.s32.f32 %v202
        %v219 = vcvt.s32.f32 %v203
        %v220 = vld [vmem:[#allocation5] sm:$0x1]
        %v222 = vperm.slane %v220, 0
        %v224 = vmul.f32 %v204, %v222
        %v225 = vmul.f32 %v205, %v222
        %v226 = vmul.f32 %v206, %v222
        %v227 = vmul.f32 %v207, %v222
        %v228 = vmul.f32 %v208, %v222
        %v229 = vmul.f32 %v209, %v222
        %v230 = vmul.f32 %v210, %v222
        %v231 = vmul.f32 %v211, %v222
        %v232 = vmul.f32 %v212, %v222
        %v233 = vmul.f32 %v213, %v222
        %v234 = vmul.f32 %v214, %v222
        %v235 = vmul.f32 %v215, %v222
        %v236 = vmul.f32 %v216, %v222
        %v237 = vmul.f32 %v217, %v222
        %v238 = vmul.f32 %v218, %v222
        %v239 = vmul.f32 %v219, %v222
        %v240 = vld [vmem:[#allocation2] sm:$0x1]
        %v242 = vperm.slane %v240, 0
        %v244 = vadd.f32 %v224, %v242
        %v245 = vadd.f32 %v225, %v242
        %v246 = vadd.f32 %v226, %v242
        %v247 = vadd.f32 %v227, %v242
        %v248 = vadd.f32 %v228, %v242
        %v249 = vadd.f32 %v229, %v242
        %v250 = vadd.f32 %v230, %v242
        %v251 = vadd.f32 %v231, %v242
        %v252 = vadd.f32 %v232, %v242
        %v253 = vadd.f32 %v233, %v242
        %v254 = vadd.f32 %v234, %v242
        %v255 = vadd.f32 %v235, %v242
        %v256 = vadd.f32 %v236, %v242
        %v257 = vadd.f32 %v237, %v242
        %v258 = vadd.f32 %v238, %v242
        %v259 = vadd.f32 %v239, %v242
        %v260 = vand.u32 2147483647, %v244
        %vm261 = vcmp.le.f32.partialorder %v260, 0.7853982
        %vm262 = vcmp.lt.s32.totalorder %v244, 0
        %v263 = vand.u32 %v244, 2139095040
        %v264 = vshrl.u32 %v263, 23
        %v265 = vsub.s32 %v264, 127
        %v266 = vand.u32 2147483647, %v244
        %v267 = vand.u32 %v266, 8388607
        %v268 = vor.u32 %v267, 8388608
        %v269 = vsub.s32 0, %v268
        %v270 = vadd.s32 %v265, 1
        %vm271 = vcmp.gt.s32.totalorder %v270, 0
        %v272 = vsel %vm271, %v270, 0
        %v273 = vshrl.u32 %v272, 5
        %v274 = vand.u32 %v272, 31
        %v275 = vsub.s32 32, %v274
        %v276 = vshrl.u32 683565275, %v275
        %v277 = vshll.u32 683565275, %v274
        %v278 = vshrl.u32 2475754826, %v275
        %v279 = vor.u32 %v277, %v278
        %v280 = vshll.u32 2475754826, %v274
        %v281 = vshrl.u32 2131351028, %v275
        %v282 = vor.u32 %v280, %v281
        %v283 = vshll.u32 2131351028, %v274
        %v284 = vshrl.u32 2102212464, %v275
        %v285 = vor.u32 %v283, %v284
        %v286 = vshll.u32 2102212464, %v274
        %v287 = vshrl.u32 920167782, %v275
        %v288 = vor.u32 %v286, %v287
        %v289 = vshll.u32 920167782, %v274
        %v290 = vshrl.u32 1326507024, %v275
        %v291 = vor.u32 %v289, %v290
        %vm292 = vcmp.lt.s32.totalorder %v273, 1
        %vm293 = vcmp.lt.s32.totalorder %v273, 2
        %vm294 = vcmp.lt.s32.totalorder %v273, 3
        %vm295 = vcmp.lt.s32.totalorder %v273, 4
        %v296 = vsel %vm292, %v276, %v279
        %v297 = vsel %vm295, %v285, 2102212464
        %v298 = vsel %vm294, %v282, %v297
        %v299 = vsel %vm293, %v296, %v298
        %v300 = vsel %vm292, %v279, %v282
        %v301 = vsel %vm295, %v288, 920167782
        %v302 = vsel %vm294, %v285, %v301
        %v303 = vsel %vm293, %v300, %v302
        %v304 = vsel %vm292, %v282, %v285
        %v305 = vsel %vm295, %v291, 1326507024
        %v306 = vsel %vm294, %v288, %v305
        %v307 = vsel %vm293, %v304, %v306
        %v308 = vshll.u32 %v268, 8
        %v309 = vand.u32 %v308, 65535
        %v310 = vshrl.u32 %v308, 16
        %v311 = vand.u32 %v307, 65535
        %v312 = vshrl.u32 %v307, 16
        %v313 = vmul.u32 %v309, %v311
        %v314 = vmul.u32 %v309, %v312
        %v315 = vmul.u32 %v310, %v311
        %v316 = vmul.u32 %v310, %v312
        %v317 = vshll.u32 %v314, 16
        %v318 = vshrl.u32 %v314, 16
        %v319 = vshll.u32 %v315, 16
        %v320 = vshrl.u32 %v315, 16
        %vm321 = vc.u32 %v313, %v317
        %v322 = vsel %vm321, 1, 0
        %v323 = vadd.s32 %v313, %v317
        %v324 = vadd.s32 %v316, %v322
        %vm325 = vc.u32 %v323, %v319
        %v326 = vsel %vm325, 1, 0
        %v327 = vadd.s32 %v323, %v319
        %v328 = vadd.s32 %v324, %v326
        %v329 = vadd.s32 %v328, %v318
        %v330 = vadd.s32 %v329, %v320
        %v331 = vand.u32 %v308, 65535
        %v332 = vshrl.u32 %v308, 16
        %v333 = vand.u32 %v303, 65535
        %v334 = vshrl.u32 %v303, 16
        %v335 = vmul.u32 %v331, %v333
        %v336 = vmul.u32 %v331, %v334
        %v337 = vmul.u32 %v332, %v333
        %v338 = vmul.u32 %v332, %v334
        %v339 = vshll.u32 %v336, 16
        %v340 = vshrl.u32 %v336, 16
        %v341 = vshll.u32 %v337, 16
        %v342 = vshrl.u32 %v337, 16
        %vm343 = vc.u32 %v335, %v339
        %v344 = vsel %vm343, 1, 0
        %v345 = vadd.s32 %v335, %v339
        %v346 = vadd.s32 %v338, %v344
        %vm347 = vc.u32 %v345, %v341
        %v348 = vsel %vm347, 1, 0
        %v349 = vadd.s32 %v345, %v341
        %v350 = vadd.s32 %v346, %v348
        %v351 = vadd.s32 %v350, %v340
        %v352 = vadd.s32 %v351, %v342
        %v353 = vmul.u32 %v308, %v299
        %v354 = vadd.s32 %v330, %v349
        %vm355 = vc.u32 %v330, %v349
        %v356 = vadd.s32 %v352, 1
        %v357 = vsel %vm355, %v356, %v352
        %v358 = vadd.s32 %v353, %v357
        %v359 = vadd.s32 %v358, 536870912
        %v360 = vshrl.u32 %v359, 30
        %v361 = vshll.u32 %v360, 30
        %v362 = vsub.s32 %v358, %v361
        %vm363 = vcmp.lt.s32.totalorder %v362, 0
        %v364 = vsub.s32 0, %v362
        %v365 = vsel %vm363, %v364, %v362
        %v366 = vclz %v365
        %v367 = vsub.s32 %v366, 2
        %vm368 = vcmp.gt.s32.totalorder 0, %v367
        %v369 = vsel %vm368, 0, %v367
        %v370 = vsub.s32 32, %v369
        %v371 = vshll.u32 %v362, %v369
        %v372 = vshrl.u32 %v354, %v370
        %v373 = vor.u32 %v371, %v372
        %v374 = vsub.s32 4294967266, %v369
        %v375 = vadd.s32 %v374, 127
        %v376 = vshll.u32 %v375, 23
        %v377 = vor.u32 4788187, %v376
        %v378 = vand.u32 2147483647, %v377
        %v380 = vcvt.s32.f32 %v373
        %v381 = vmul.f32 %v380, %v378
        %v382 = vxor.u32 %v381, 2147483648
        %v383 = vsel %vm262, %v382, %v381
        %v384 = vsub.s32 4, %v360
        %v385 = vsel %vm262, %v384, %v360
        %v386 = vsel %vm261, %v244, %v383
        %v387 = vsel %vm261, 0, %v385
        %v388 = vmul.f32 %v386, %v386
        %v389 = vmul.f32 %v388, -0.001358992
        %v390 = vadd.f32 %v389, 0.041655596
        %v391 = vmul.f32 %v388, %v390
        %v392 = vadd.f32 %v391, -0.4999988
        %v393 = vmul.f32 %v388, %v392
        %v394 = vadd.f32 1.0, %v393
        %v395 = vmul.f32 %v386, %v386
        %v396 = vmul.f32 %v395, -0.00019511016
        %v397 = vadd.f32 %v396, 0.008332121
        %v398 = vmul.f32 %v395, %v397
        %v399 = vadd.f32 %v398, -0.16666654
        %v400 = vmul.f32 %v395, %v399
        %v401 = vadd.f32 %v400, 1.0
        %v402 = vmul.f32 %v401, %v386
        %vm403 = vweird.f32 %v244
        %v404 = vadd.s32 %v387, 3
        %v405 = vand.u32 %v404, 3
        %vm406 = vcmp.lt.s32.totalorder %v405, 2
        %vm407 = vcmp.eq.s32.totalorder %v405, 0
        %v408 = vxor.u32 %v402, 2147483648
        %v409 = vsel %vm407, %v394, %v408
        %vm410 = vcmp.eq.s32.totalorder %v405, 2
        %v411 = vxor.u32 %v394, 2147483648
        %v412 = vsel %vm410, %v411, %v402
        %v413 = vsel %vm406, %v409, %v412
        %v414 = vsel %vm403, nan, %v413
        %v415 = vand.u32 2147483647, %v245
        %vm416 = vcmp.le.f32.partialorder %v415, 0.7853982
        %vm417 = vcmp.lt.s32.totalorder %v245, 0
        %v418 = vand.u32 %v245, 2139095040
        %v419 = vshrl.u32 %v418, 23
        %v420 = vsub.s32 %v419, 127
        %v421 = vand.u32 2147483647, %v245
        %v422 = vand.u32 %v421, 8388607
        %v423 = vor.u32 %v422, 8388608
        %v424 = vsub.s32 0, %v423
        %v425 = vadd.s32 %v420, 1
        %vm426 = vcmp.gt.s32.totalorder %v425, 0
        %v427 = vsel %vm426, %v425, 0
        %v428 = vshrl.u32 %v427, 5
        %v429 = vand.u32 %v427, 31
        %v430 = vsub.s32 32, %v429
        %v431 = vshrl.u32 683565275, %v430
        %v432 = vshll.u32 683565275, %v429
        %v433 = vshrl.u32 2475754826, %v430
        %v434 = vor.u32 %v432, %v433
        %v435 = vshll.u32 2475754826, %v429
        %v436 = vshrl.u32 2131351028, %v430
        %v437 = vor.u32 %v435, %v436
        %v438 = vshll.u32 2131351028, %v429
        %v439 = vshrl.u32 2102212464, %v430
        %v440 = vor.u32 %v438, %v439
        %v441 = vshll.u32 2102212464, %v429
        %v442 = vshrl.u32 920167782, %v430
        %v443 = vor.u32 %v441, %v442
        %v444 = vshll.u32 920167782, %v429
        %v445 = vshrl.u32 1326507024, %v430
        %v446 = vor.u32 %v444, %v445
        %vm447 = vcmp.lt.s32.totalorder %v428, 1
        %vm448 = vcmp.lt.s32.totalorder %v428, 2
        %vm449 = vcmp.lt.s32.totalorder %v428, 3
        %vm450 = vcmp.lt.s32.totalorder %v428, 4
        %v451 = vsel %vm447, %v431, %v434
        %v452 = vsel %vm450, %v440, 2102212464
        %v453 = vsel %vm449, %v437, %v452
        %v454 = vsel %vm448, %v451, %v453
        %v455 = vsel %vm447, %v434, %v437
        %v456 = vsel %vm450, %v443, 920167782
        %v457 = vsel %vm449, %v440, %v456
        %v458 = vsel %vm448, %v455, %v457
        %v459 = vsel %vm447, %v437, %v440
        %v460 = vsel %vm450, %v446, 1326507024
        %v461 = vsel %vm449, %v443, %v460
        %v462 = vsel %vm448, %v459, %v461
        %v463 = vshll.u32 %v423, 8
        %v464 = vand.u32 %v463, 65535
        %v465 = vshrl.u32 %v463, 16
        %v466 = vand.u32 %v462, 65535
        %v467 = vshrl.u32 %v462, 16
        %v468 = vmul.u32 %v464, %v466
        %v469 = vmul.u32 %v464, %v467
        %v470 = vmul.u32 %v465, %v466
        %v471 = vmul.u32 %v465, %v467
        %v472 = vshll.u32 %v469, 16
        %v473 = vshrl.u32 %v469, 16
        %v474 = vshll.u32 %v470, 16
        %v475 = vshrl.u32 %v470, 16
        %vm476 = vc.u32 %v468, %v472
        %v477 = vsel %vm476, 1, 0
        %v478 = vadd.s32 %v468, %v472
        %v479 = vadd.s32 %v471, %v477
        %vm480 = vc.u32 %v478, %v474
        %v481 = vsel %vm480, 1, 0
        %v482 = vadd.s32 %v478, %v474
        %v483 = vadd.s32 %v479, %v481
        %v484 = vadd.s32 %v483, %v473
        %v485 = vadd.s32 %v484, %v475
        %v486 = vand.u32 %v463, 65535
        %v487 = vshrl.u32 %v463, 16
        %v488 = vand.u32 %v458, 65535
        %v489 = vshrl.u32 %v458, 16
        %v490 = vmul.u32 %v486, %v488
        %v491 = vmul.u32 %v486, %v489
        %v492 = vmul.u32 %v487, %v488
        %v493 = vmul.u32 %v487, %v489
        %v494 = vshll.u32 %v491, 16
        %v495 = vshrl.u32 %v491, 16
        %v496 = vshll.u32 %v492, 16
        %v497 = vshrl.u32 %v492, 16
        %vm498 = vc.u32 %v490, %v494
        %v499 = vsel %vm498, 1, 0
        %v500 = vadd.s32 %v490, %v494
        %v501 = vadd.s32 %v493, %v499
        %vm502 = vc.u32 %v500, %v496
        %v503 = vsel %vm502, 1, 0
        %v504 = vadd.s32 %v500, %v496
        %v505 = vadd.s32 %v501, %v503
        %v506 = vadd.s32 %v505, %v495
        %v507 = vadd.s32 %v506, %v497
        %v508 = vmul.u32 %v463, %v454
        %v509 = vadd.s32 %v485, %v504
        %vm510 = vc.u32 %v485, %v504
        %v511 = vadd.s32 %v507, 1
        %v512 = vsel %vm510, %v511, %v507
        %v513 = vadd.s32 %v508, %v512
        %v514 = vadd.s32 %v513, 536870912
        %v515 = vshrl.u32 %v514, 30
        %v516 = vshll.u32 %v515, 30
        %v517 = vsub.s32 %v513, %v516
        %vm518 = vcmp.lt.s32.totalorder %v517, 0
        %v519 = vsub.s32 0, %v517
        %v520 = vsel %vm518, %v519, %v517
        %v521 = vclz %v520
        %v522 = vsub.s32 %v521, 2
        %vm523 = vcmp.gt.s32.totalorder 0, %v522
        %v524 = vsel %vm523, 0, %v522
        %v525 = vsub.s32 32, %v524
        %v526 = vshll.u32 %v517, %v524
        %v527 = vshrl.u32 %v509, %v525
        %v528 = vor.u32 %v526, %v527
        %v529 = vsub.s32 4294967266, %v524
        %v530 = vadd.s32 %v529, 127
        %v531 = vshll.u32 %v530, 23
        %v532 = vor.u32 4788187, %v531
        %v533 = vand.u32 2147483647, %v532
        %v535 = vcvt.s32.f32 %v528
        %v536 = vmul.f32 %v535, %v533
        %v537 = vxor.u32 %v536, 2147483648
        %v538 = vsel %vm417, %v537, %v536
        %v539 = vsub.s32 4, %v515
        %v540 = vsel %vm417, %v539, %v515
        %v541 = vsel %vm416, %v245, %v538
        %v542 = vsel %vm416, 0, %v540
        %v543 = vmul.f32 %v541, %v541
        %v544 = vmul.f32 %v543, -0.001358992
        %v545 = vadd.f32 %v544, 0.041655596
        %v546 = vmul.f32 %v543, %v545
        %v547 = vadd.f32 %v546, -0.4999988
        %v548 = vmul.f32 %v543, %v547
        %v549 = vadd.f32 1.0, %v548
        %v550 = vmul.f32 %v541, %v541
        %v551 = vmul.f32 %v550, -0.00019511016
        %v552 = vadd.f32 %v551, 0.008332121
        %v553 = vmul.f32 %v550, %v552
        %v554 = vadd.f32 %v553, -0.16666654
        %v555 = vmul.f32 %v550, %v554
        %v556 = vadd.f32 %v555, 1.0
        %v557 = vmul.f32 %v556, %v541
        %vm558 = vweird.f32 %v245
        %v559 = vadd.s32 %v542, 3
        %v560 = vand.u32 %v559, 3
        %vm561 = vcmp.lt.s32.totalorder %v560, 2
        %vm562 = vcmp.eq.s32.totalorder %v560, 0
        %v563 = vxor.u32 %v557, 2147483648
        %v564 = vsel %vm562, %v549, %v563
        %vm565 = vcmp.eq.s32.totalorder %v560, 2
        %v566 = vxor.u32 %v549, 2147483648
        %v567 = vsel %vm565, %v566, %v557
        %v568 = vsel %vm561, %v564, %v567
        %v569 = vsel %vm558, nan, %v568
        %v570 = vand.u32 2147483647, %v246
        %vm571 = vcmp.le.f32.partialorder %v570, 0.7853982
        %vm572 = vcmp.lt.s32.totalorder %v246, 0
        %v573 = vand.u32 %v246, 2139095040
        %v574 = vshrl.u32 %v573, 23
        %v575 = vsub.s32 %v574, 127
        %v576 = vand.u32 2147483647, %v246
        %v577 = vand.u32 %v576, 8388607
        %v578 = vor.u32 %v577, 8388608
        %v579 = vsub.s32 0, %v578
        %v580 = vadd.s32 %v575, 1
        %vm581 = vcmp.gt.s32.totalorder %v580, 0
        %v582 = vsel %vm581, %v580, 0
        %v583 = vshrl.u32 %v582, 5
        %v584 = vand.u32 %v582, 31
        %v585 = vsub.s32 32, %v584
        %v586 = vshrl.u32 683565275, %v585
        %v587 = vshll.u32 683565275, %v584
        %v588 = vshrl.u32 2475754826, %v585
        %v589 = vor.u32 %v587, %v588
        %v590 = vshll.u32 2475754826, %v584
        %v591 = vshrl.u32 2131351028, %v585
        %v592 = vor.u32 %v590, %v591
        %v593 = vshll.u32 2131351028, %v584
        %v594 = vshrl.u32 2102212464, %v585
        %v595 = vor.u32 %v593, %v594
        %v596 = vshll.u32 2102212464, %v584
        %v597 = vshrl.u32 920167782, %v585
        %v598 = vor.u32 %v596, %v597
        %v599 = vshll.u32 920167782, %v584
        %v600 = vshrl.u32 1326507024, %v585
        %v601 = vor.u32 %v599, %v600
        %vm602 = vcmp.lt.s32.totalorder %v583, 1
        %vm603 = vcmp.lt.s32.totalorder %v583, 2
        %vm604 = vcmp.lt.s32.totalorder %v583, 3
        %vm605 = vcmp.lt.s32.totalorder %v583, 4
        %v606 = vsel %vm602, %v586, %v589
        %v607 = vsel %vm605, %v595, 2102212464
        %v608 = vsel %vm604, %v592, %v607
        %v609 = vsel %vm603, %v606, %v608
        %v610 = vsel %vm602, %v589, %v592
        %v611 = vsel %vm605, %v598, 920167782
        %v612 = vsel %vm604, %v595, %v611
        %v613 = vsel %vm603, %v610, %v612
        %v614 = vsel %vm602, %v592, %v595
        %v615 = vsel %vm605, %v601, 1326507024
        %v616 = vsel %vm604, %v598, %v615
        %v617 = vsel %vm603, %v614, %v616
        %v618 = vshll.u32 %v578, 8
        %v619 = vand.u32 %v618, 65535
        %v620 = vshrl.u32 %v618, 16
        %v621 = vand.u32 %v617, 65535
        %v622 = vshrl.u32 %v617, 16
        %v623 = vmul.u32 %v619, %v621
        %v624 = vmul.u32 %v619, %v622
        %v625 = vmul.u32 %v620, %v621
        %v626 = vmul.u32 %v620, %v622
        %v627 = vshll.u32 %v624, 16
        %v628 = vshrl.u32 %v624, 16
        %v629 = vshll.u32 %v625, 16
        %v630 = vshrl.u32 %v625, 16
        %vm631 = vc.u32 %v623, %v627
        %v632 = vsel %vm631, 1, 0
        %v633 = vadd.s32 %v623, %v627
        %v634 = vadd.s32 %v626, %v632
        %vm635 = vc.u32 %v633, %v629
        %v636 = vsel %vm635, 1, 0
        %v637 = vadd.s32 %v633, %v629
        %v638 = vadd.s32 %v634, %v636
        %v639 = vadd.s32 %v638, %v628
        %v640 = vadd.s32 %v639, %v630
        %v641 = vand.u32 %v618, 65535
        %v642 = vshrl.u32 %v618, 16
        %v643 = vand.u32 %v613, 65535
        %v644 = vshrl.u32 %v613, 16
        %v645 = vmul.u32 %v641, %v643
        %v646 = vmul.u32 %v641, %v644
        %v647 = vmul.u32 %v642, %v643
        %v648 = vmul.u32 %v642, %v644
        %v649 = vshll.u32 %v646, 16
        %v650 = vshrl.u32 %v646, 16
        %v651 = vshll.u32 %v647, 16
        %v652 = vshrl.u32 %v647, 16
        %vm653 = vc.u32 %v645, %v649
        %v654 = vsel %vm653, 1, 0
        %v655 = vadd.s32 %v645, %v649
        %v656 = vadd.s32 %v648, %v654
        %vm657 = vc.u32 %v655, %v651
        %v658 = vsel %vm657, 1, 0
        %v659 = vadd.s32 %v655, %v651
        %v660 = vadd.s32 %v656, %v658
        %v661 = vadd.s32 %v660, %v650
        %v662 = vadd.s32 %v661, %v652
        %v663 = vmul.u32 %v618, %v609
        %v664 = vadd.s32 %v640, %v659
        %vm665 = vc.u32 %v640, %v659
        %v666 = vadd.s32 %v662, 1
        %v667 = vsel %vm665, %v666, %v662
        %v668 = vadd.s32 %v663, %v667
        %v669 = vadd.s32 %v668, 536870912
        %v670 = vshrl.u32 %v669, 30
        %v671 = vshll.u32 %v670, 30
        %v672 = vsub.s32 %v668, %v671
        %vm673 = vcmp.lt.s32.totalorder %v672, 0
        %v674 = vsub.s32 0, %v672
        %v675 = vsel %vm673, %v674, %v672
        %v676 = vclz %v675
        %v677 = vsub.s32 %v676, 2
        %vm678 = vcmp.gt.s32.totalorder 0, %v677
        %v679 = vsel %vm678, 0, %v677
        %v680 = vsub.s32 32, %v679
        %v681 = vshll.u32 %v672, %v679
        %v682 = vshrl.u32 %v664, %v680
        %v683 = vor.u32 %v681, %v682
        %v684 = vsub.s32 4294967266, %v679
        %v685 = vadd.s32 %v684, 127
        %v686 = vshll.u32 %v685, 23
        %v687 = vor.u32 4788187, %v686
        %v688 = vand.u32 2147483647, %v687
        %v690 = vcvt.s32.f32 %v683
        %v691 = vmul.f32 %v690, %v688
        %v692 = vxor.u32 %v691, 2147483648
        %v693 = vsel %vm572, %v692, %v691
        %v694 = vsub.s32 4, %v670
        %v695 = vsel %vm572, %v694, %v670
        %v696 = vsel %vm571, %v246, %v693
        %v697 = vsel %vm571, 0, %v695
        %v698 = vmul.f32 %v696, %v696
        %v699 = vmul.f32 %v698, -0.001358992
        %v700 = vadd.f32 %v699, 0.041655596
        %v701 = vmul.f32 %v698, %v700
        %v702 = vadd.f32 %v701, -0.4999988
        %v703 = vmul.f32 %v698, %v702
        %v704 = vadd.f32 1.0, %v703
        %v705 = vmul.f32 %v696, %v696
        %v706 = vmul.f32 %v705, -0.00019511016
        %v707 = vadd.f32 %v706, 0.008332121
        %v708 = vmul.f32 %v705, %v707
        %v709 = vadd.f32 %v708, -0.16666654
        %v710 = vmul.f32 %v705, %v709
        %v711 = vadd.f32 %v710, 1.0
        %v712 = vmul.f32 %v711, %v696
        %vm713 = vweird.f32 %v246
        %v714 = vadd.s32 %v697, 3
        %v715 = vand.u32 %v714, 3
        %vm716 = vcmp.lt.s32.totalorder %v715, 2
        %vm717 = vcmp.eq.s32.totalorder %v715, 0
        %v718 = vxor.u32 %v712, 2147483648
        %v719 = vsel %vm717, %v704, %v718
        %vm720 = vcmp.eq.s32.totalorder %v715, 2
        %v721 = vxor.u32 %v704, 2147483648
        %v722 = vsel %vm720, %v721, %v712
        %v723 = vsel %vm716, %v719, %v722
        %v724 = vsel %vm713, nan, %v723
        %v725 = vand.u32 2147483647, %v247
        %vm726 = vcmp.le.f32.partialorder %v725, 0.7853982
        %vm727 = vcmp.lt.s32.totalorder %v247, 0
        %v728 = vand.u32 %v247, 2139095040
        %v729 = vshrl.u32 %v728, 23
        %v730 = vsub.s32 %v729, 127
        %v731 = vand.u32 2147483647, %v247
        %v732 = vand.u32 %v731, 8388607
        %v733 = vor.u32 %v732, 8388608
        %v734 = vsub.s32 0, %v733
        %v735 = vadd.s32 %v730, 1
        %vm736 = vcmp.gt.s32.totalorder %v735, 0
        %v737 = vsel %vm736, %v735, 0
        %v738 = vshrl.u32 %v737, 5
        %v739 = vand.u32 %v737, 31
        %v740 = vsub.s32 32, %v739
        %v741 = vshrl.u32 683565275, %v740
        %v742 = vshll.u32 683565275, %v739
        %v743 = vshrl.u32 2475754826, %v740
        %v744 = vor.u32 %v742, %v743
        %v745 = vshll.u32 2475754826, %v739
        %v746 = vshrl.u32 2131351028, %v740
        %v747 = vor.u32 %v745, %v746
        %v748 = vshll.u32 2131351028, %v739
        %v749 = vshrl.u32 2102212464, %v740
        %v750 = vor.u32 %v748, %v749
        %v751 = vshll.u32 2102212464, %v739
        %v752 = vshrl.u32 920167782, %v740
        %v753 = vor.u32 %v751, %v752
        %v754 = vshll.u32 920167782, %v739
        %v755 = vshrl.u32 1326507024, %v740
        %v756 = vor.u32 %v754, %v755
        %vm757 = vcmp.lt.s32.totalorder %v738, 1
        %vm758 = vcmp.lt.s32.totalorder %v738, 2
        %vm759 = vcmp.lt.s32.totalorder %v738, 3
        %vm760 = vcmp.lt.s32.totalorder %v738, 4
        %v761 = vsel %vm757, %v741, %v744
        %v762 = vsel %vm760, %v750, 2102212464
        %v763 = vsel %vm759, %v747, %v762
        %v764 = vsel %vm758, %v761, %v763
        %v765 = vsel %vm757, %v744, %v747
        %v766 = vsel %vm760, %v753, 920167782
        %v767 = vsel %vm759, %v750, %v766
        %v768 = vsel %vm758, %v765, %v767
        %v769 = vsel %vm757, %v747, %v750
        %v770 = vsel %vm760, %v756, 1326507024
        %v771 = vsel %vm759, %v753, %v770
        %v772 = vsel %vm758, %v769, %v771
        %v773 = vshll.u32 %v733, 8
        %v774 = vand.u32 %v773, 65535
        %v775 = vshrl.u32 %v773, 16
        %v776 = vand.u32 %v772, 65535
        %v777 = vshrl.u32 %v772, 16
        %v778 = vmul.u32 %v774, %v776
        %v779 = vmul.u32 %v774, %v777
        %v780 = vmul.u32 %v775, %v776
        %v781 = vmul.u32 %v775, %v777
        %v782 = vshll.u32 %v779, 16
        %v783 = vshrl.u32 %v779, 16
        %v784 = vshll.u32 %v780, 16
        %v785 = vshrl.u32 %v780, 16
        %vm786 = vc.u32 %v778, %v782
        %v787 = vsel %vm786, 1, 0
        %v788 = vadd.s32 %v778, %v782
        %v789 = vadd.s32 %v781, %v787
        %vm790 = vc.u32 %v788, %v784
        %v791 = vsel %vm790, 1, 0
        %v792 = vadd.s32 %v788, %v784
        %v793 = vadd.s32 %v789, %v791
        %v794 = vadd.s32 %v793, %v783
        %v795 = vadd.s32 %v794, %v785
        %v796 = vand.u32 %v773, 65535
        %v797 = vshrl.u32 %v773, 16
        %v798 = vand.u32 %v768, 65535
        %v799 = vshrl.u32 %v768, 16
        %v800 = vmul.u32 %v796, %v798
        %v801 = vmul.u32 %v796, %v799
        %v802 = vmul.u32 %v797, %v798
        %v803 = vmul.u32 %v797, %v799
        %v804 = vshll.u32 %v801, 16
        %v805 = vshrl.u32 %v801, 16
        %v806 = vshll.u32 %v802, 16
        %v807 = vshrl.u32 %v802, 16
        %vm808 = vc.u32 %v800, %v804
        %v809 = vsel %vm808, 1, 0
        %v810 = vadd.s32 %v800, %v804
        %v811 = vadd.s32 %v803, %v809
        %vm812 = vc.u32 %v810, %v806
        %v813 = vsel %vm812, 1, 0
        %v814 = vadd.s32 %v810, %v806
        %v815 = vadd.s32 %v811, %v813
        %v816 = vadd.s32 %v815, %v805
        %v817 = vadd.s32 %v816, %v807
        %v818 = vmul.u32 %v773, %v764
        %v819 = vadd.s32 %v795, %v814
        %vm820 = vc.u32 %v795, %v814
        %v821 = vadd.s32 %v817, 1
        %v822 = vsel %vm820, %v821, %v817
        %v823 = vadd.s32 %v818, %v822
        %v824 = vadd.s32 %v823, 536870912
        %v825 = vshrl.u32 %v824, 30
        %v826 = vshll.u32 %v825, 30
        %v827 = vsub.s32 %v823, %v826
        %vm828 = vcmp.lt.s32.totalorder %v827, 0
        %v829 = vsub.s32 0, %v827
        %v830 = vsel %vm828, %v829, %v827
        %v831 = vclz %v830
        %v832 = vsub.s32 %v831, 2
        %vm833 = vcmp.gt.s32.totalorder 0, %v832
        %v834 = vsel %vm833, 0, %v832
        %v835 = vsub.s32 32, %v834
        %v836 = vshll.u32 %v827, %v834
        %v837 = vshrl.u32 %v819, %v835
        %v838 = vor.u32 %v836, %v837
        %v839 = vsub.s32 4294967266, %v834
        %v840 = vadd.s32 %v839, 127
        %v841 = vshll.u32 %v840, 23
        %v842 = vor.u32 4788187, %v841
        %v843 = vand.u32 2147483647, %v842
        %v845 = vcvt.s32.f32 %v838
        %v846 = vmul.f32 %v845, %v843
        %v847 = vxor.u32 %v846, 2147483648
        %v848 = vsel %vm727, %v847, %v846
        %v849 = vsub.s32 4, %v825
        %v850 = vsel %vm727, %v849, %v825
        %v851 = vsel %vm726, %v247, %v848
        %v852 = vsel %vm726, 0, %v850
        %v853 = vmul.f32 %v851, %v851
        %v854 = vmul.f32 %v853, -0.001358992
        %v855 = vadd.f32 %v854, 0.041655596
        %v856 = vmul.f32 %v853, %v855
        %v857 = vadd.f32 %v856, -0.4999988
        %v858 = vmul.f32 %v853, %v857
        %v859 = vadd.f32 1.0, %v858
        %v860 = vmul.f32 %v851, %v851
        %v861 = vmul.f32 %v860, -0.00019511016
        %v862 = vadd.f32 %v861, 0.008332121
        %v863 = vmul.f32 %v860, %v862
        %v864 = vadd.f32 %v863, -0.16666654
        %v865 = vmul.f32 %v860, %v864
        %v866 = vadd.f32 %v865, 1.0
        %v867 = vmul.f32 %v866, %v851
        %vm868 = vweird.f32 %v247
        %v869 = vadd.s32 %v852, 3
        %v870 = vand.u32 %v869, 3
        %vm871 = vcmp.lt.s32.totalorder %v870, 2
        %vm872 = vcmp.eq.s32.totalorder %v870, 0
        %v873 = vxor.u32 %v867, 2147483648
        %v874 = vsel %vm872, %v859, %v873
        %vm875 = vcmp.eq.s32.totalorder %v870, 2
        %v876 = vxor.u32 %v859, 2147483648
        %v877 = vsel %vm875, %v876, %v867
        %v878 = vsel %vm871, %v874, %v877
        %v879 = vsel %vm868, nan, %v878
        %v880 = vand.u32 2147483647, %v248
        %vm881 = vcmp.le.f32.partialorder %v880, 0.7853982
        %vm882 = vcmp.lt.s32.totalorder %v248, 0
        %v883 = vand.u32 %v248, 2139095040
        %v884 = vshrl.u32 %v883, 23
        %v885 = vsub.s32 %v884, 127
        %v886 = vand.u32 2147483647, %v248
        %v887 = vand.u32 %v886, 8388607
        %v888 = vor.u32 %v887, 8388608
        %v889 = vsub.s32 0, %v888
        %v890 = vadd.s32 %v885, 1
        %vm891 = vcmp.gt.s32.totalorder %v890, 0
        %v892 = vsel %vm891, %v890, 0
        %v893 = vshrl.u32 %v892, 5
        %v894 = vand.u32 %v892, 31
        %v895 = vsub.s32 32, %v894
        %v896 = vshrl.u32 683565275, %v895
        %v897 = vshll.u32 683565275, %v894
        %v898 = vshrl.u32 2475754826, %v895
        %v899 = vor.u32 %v897, %v898
        %v900 = vshll.u32 2475754826, %v894
        %v901 = vshrl.u32 2131351028, %v895
        %v902 = vor.u32 %v900, %v901
        %v903 = vshll.u32 2131351028, %v894
        %v904 = vshrl.u32 2102212464, %v895
        %v905 = vor.u32 %v903, %v904
        %v906 = vshll.u32 2102212464, %v894
        %v907 = vshrl.u32 920167782, %v895
        %v908 = vor.u32 %v906, %v907
        %v909 = vshll.u32 920167782, %v894
        %v910 = vshrl.u32 1326507024, %v895
        %v911 = vor.u32 %v909, %v910
        %vm912 = vcmp.lt.s32.totalorder %v893, 1
        %vm913 = vcmp.lt.s32.totalorder %v893, 2
        %vm914 = vcmp.lt.s32.totalorder %v893, 3
        %vm915 = vcmp.lt.s32.totalorder %v893, 4
        %v916 = vsel %vm912, %v896, %v899
        %v917 = vsel %vm915, %v905, 2102212464
        %v918 = vsel %vm914, %v902, %v917
        %v919 = vsel %vm913, %v916, %v918
        %v920 = vsel %vm912, %v899, %v902
        %v921 = vsel %vm915, %v908, 920167782
        %v922 = vsel %vm914, %v905, %v921
        %v923 = vsel %vm913, %v920, %v922
        %v924 = vsel %vm912, %v902, %v905
        %v925 = vsel %vm915, %v911, 1326507024
        %v926 = vsel %vm914, %v908, %v925
        %v927 = vsel %vm913, %v924, %v926
        %v928 = vshll.u32 %v888, 8
        %v929 = vand.u32 %v928, 65535
        %v930 = vshrl.u32 %v928, 16
        %v931 = vand.u32 %v927, 65535
        %v932 = vshrl.u32 %v927, 16
        %v933 = vmul.u32 %v929, %v931
        %v934 = vmul.u32 %v929, %v932
        %v935 = vmul.u32 %v930, %v931
        %v936 = vmul.u32 %v930, %v932
        %v937 = vshll.u32 %v934, 16
        %v938 = vshrl.u32 %v934, 16
        %v939 = vshll.u32 %v935, 16
        %v940 = vshrl.u32 %v935, 16
        %vm941 = vc.u32 %v933, %v937
        %v942 = vsel %vm941, 1, 0
        %v943 = vadd.s32 %v933, %v937
        %v944 = vadd.s32 %v936, %v942
        %vm945 = vc.u32 %v943, %v939
        %v946 = vsel %vm945, 1, 0
        %v947 = vadd.s32 %v943, %v939
        %v948 = vadd.s32 %v944, %v946
        %v949 = vadd.s32 %v948, %v938
        %v950 = vadd.s32 %v949, %v940
        %v951 = vand.u32 %v928, 65535
        %v952 = vshrl.u32 %v928, 16
        %v953 = vand.u32 %v923, 65535
        %v954 = vshrl.u32 %v923, 16
        %v955 = vmul.u32 %v951, %v953
        %v956 = vmul.u32 %v951, %v954
        %v957 = vmul.u32 %v952, %v953
        %v958 = vmul.u32 %v952, %v954
        %v959 = vshll.u32 %v956, 16
        %v960 = vshrl.u32 %v956, 16
        %v961 = vshll.u32 %v957, 16
        %v962 = vshrl.u32 %v957, 16
        %vm963 = vc.u32 %v955, %v959
        %v964 = vsel %vm963, 1, 0
        %v965 = vadd.s32 %v955, %v959
        %v966 = vadd.s32 %v958, %v964
        %vm967 = vc.u32 %v965, %v961
        %v968 = vsel %vm967, 1, 0
        %v969 = vadd.s32 %v965, %v961
        %v970 = vadd.s32 %v966, %v968
        %v971 = vadd.s32 %v970, %v960
        %v972 = vadd.s32 %v971, %v962
        %v973 = vmul.u32 %v928, %v919
        %v974 = vadd.s32 %v950, %v969
        %vm975 = vc.u32 %v950, %v969
        %v976 = vadd.s32 %v972, 1
        %v977 = vsel %vm975, %v976, %v972
        %v978 = vadd.s32 %v973, %v977
        %v979 = vadd.s32 %v978, 536870912
        %v980 = vshrl.u32 %v979, 30
        %v981 = vshll.u32 %v980, 30
        %v982 = vsub.s32 %v978, %v981
        %vm983 = vcmp.lt.s32.totalorder %v982, 0
        %v984 = vsub.s32 0, %v982
        %v985 = vsel %vm983, %v984, %v982
        %v986 = vclz %v985
        %v987 = vsub.s32 %v986, 2
        %vm988 = vcmp.gt.s32.totalorder 0, %v987
        %v989 = vsel %vm988, 0, %v987
        %v990 = vsub.s32 32, %v989
        %v991 = vshll.u32 %v982, %v989
        %v992 = vshrl.u32 %v974, %v990
        %v993 = vor.u32 %v991, %v992
        %v994 = vsub.s32 4294967266, %v989
        %v995 = vadd.s32 %v994, 127
        %v996 = vshll.u32 %v995, 23
        %v997 = vor.u32 4788187, %v996
        %v998 = vand.u32 2147483647, %v997
        %v1000 = vcvt.s32.f32 %v993
        %v1001 = vmul.f32 %v1000, %v998
        %v1002 = vxor.u32 %v1001, 2147483648
        %v1003 = vsel %vm882, %v1002, %v1001
        %v1004 = vsub.s32 4, %v980
        %v1005 = vsel %vm882, %v1004, %v980
        %v1006 = vsel %vm881, %v248, %v1003
        %v1007 = vsel %vm881, 0, %v1005
        %v1008 = vmul.f32 %v1006, %v1006
        %v1009 = vmul.f32 %v1008, -0.001358992
        %v1010 = vadd.f32 %v1009, 0.041655596
        %v1011 = vmul.f32 %v1008, %v1010
        %v1012 = vadd.f32 %v1011, -0.4999988
        %v1013 = vmul.f32 %v1008, %v1012
        %v1014 = vadd.f32 1.0, %v1013
        %v1015 = vmul.f32 %v1006, %v1006
        %v1016 = vmul.f32 %v1015, -0.00019511016
        %v1017 = vadd.f32 %v1016, 0.008332121
        %v1018 = vmul.f32 %v1015, %v1017
        %v1019 = vadd.f32 %v1018, -0.16666654
        %v1020 = vmul.f32 %v1015, %v1019
        %v1021 = vadd.f32 %v1020, 1.0
        %v1022 = vmul.f32 %v1021, %v1006
        %vm1023 = vweird.f32 %v248
        %v1024 = vadd.s32 %v1007, 3
        %v1025 = vand.u32 %v1024, 3
        %vm1026 = vcmp.lt.s32.totalorder %v1025, 2
        %vm1027 = vcmp.eq.s32.totalorder %v1025, 0
        %v1028 = vxor.u32 %v1022, 2147483648
        %v1029 = vsel %vm1027, %v1014, %v1028
        %vm1030 = vcmp.eq.s32.totalorder %v1025, 2
        %v1031 = vxor.u32 %v1014, 2147483648
        %v1032 = vsel %vm1030, %v1031, %v1022
        %v1033 = vsel %vm1026, %v1029, %v1032
        %v1034 = vsel %vm1023, nan, %v1033
        %v1035 = vand.u32 2147483647, %v249
        %vm1036 = vcmp.le.f32.partialorder %v1035, 0.7853982
        %vm1037 = vcmp.lt.s32.totalorder %v249, 0
        %v1038 = vand.u32 %v249, 2139095040
        %v1039 = vshrl.u32 %v1038, 23
        %v1040 = vsub.s32 %v1039, 127
        %v1041 = vand.u32 2147483647, %v249
        %v1042 = vand.u32 %v1041, 8388607
        %v1043 = vor.u32 %v1042, 8388608
        %v1044 = vsub.s32 0, %v1043
        %v1045 = vadd.s32 %v1040, 1
        %vm1046 = vcmp.gt.s32.totalorder %v1045, 0
        %v1047 = vsel %vm1046, %v1045, 0
        %v1048 = vshrl.u32 %v1047, 5
        %v1049 = vand.u32 %v1047, 31
        %v1050 = vsub.s32 32, %v1049
        %v1051 = vshrl.u32 683565275, %v1050
        %v1052 = vshll.u32 683565275, %v1049
        %v1053 = vshrl.u32 2475754826, %v1050
        %v1054 = vor.u32 %v1052, %v1053
        %v1055 = vshll.u32 2475754826, %v1049
        %v1056 = vshrl.u32 2131351028, %v1050
        %v1057 = vor.u32 %v1055, %v1056
        %v1058 = vshll.u32 2131351028, %v1049
        %v1059 = vshrl.u32 2102212464, %v1050
        %v1060 = vor.u32 %v1058, %v1059
        %v1061 = vshll.u32 2102212464, %v1049
        %v1062 = vshrl.u32 920167782, %v1050
        %v1063 = vor.u32 %v1061, %v1062
        %v1064 = vshll.u32 920167782, %v1049
        %v1065 = vshrl.u32 1326507024, %v1050
        %v1066 = vor.u32 %v1064, %v1065
        %vm1067 = vcmp.lt.s32.totalorder %v1048, 1
        %vm1068 = vcmp.lt.s32.totalorder %v1048, 2
        %vm1069 = vcmp.lt.s32.totalorder %v1048, 3
        %vm1070 = vcmp.lt.s32.totalorder %v1048, 4
        %v1071 = vsel %vm1067, %v1051, %v1054
        %v1072 = vsel %vm1070, %v1060, 2102212464
        %v1073 = vsel %vm1069, %v1057, %v1072
        %v1074 = vsel %vm1068, %v1071, %v1073
        %v1075 = vsel %vm1067, %v1054, %v1057
        %v1076 = vsel %vm1070, %v1063, 920167782
        %v1077 = vsel %vm1069, %v1060, %v1076
        %v1078 = vsel %vm1068, %v1075, %v1077
        %v1079 = vsel %vm1067, %v1057, %v1060
        %v1080 = vsel %vm1070, %v1066, 1326507024
        %v1081 = vsel %vm1069, %v1063, %v1080
        %v1082 = vsel %vm1068, %v1079, %v1081
        %v1083 = vshll.u32 %v1043, 8
        %v1084 = vand.u32 %v1083, 65535
        %v1085 = vshrl.u32 %v1083, 16
        %v1086 = vand.u32 %v1082, 65535
        %v1087 = vshrl.u32 %v1082, 16
        %v1088 = vmul.u32 %v1084, %v1086
        %v1089 = vmul.u32 %v1084, %v1087
        %v1090 = vmul.u32 %v1085, %v1086
        %v1091 = vmul.u32 %v1085, %v1087
        %v1092 = vshll.u32 %v1089, 16
        %v1093 = vshrl.u32 %v1089, 16
        %v1094 = vshll.u32 %v1090, 16
        %v1095 = vshrl.u32 %v1090, 16
        %vm1096 = vc.u32 %v1088, %v1092
        %v1097 = vsel %vm1096, 1, 0
        %v1098 = vadd.s32 %v1088, %v1092
        %v1099 = vadd.s32 %v1091, %v1097
        %vm1100 = vc.u32 %v1098, %v1094
        %v1101 = vsel %vm1100, 1, 0
        %v1102 = vadd.s32 %v1098, %v1094
        %v1103 = vadd.s32 %v1099, %v1101
        %v1104 = vadd.s32 %v1103, %v1093
        %v1105 = vadd.s32 %v1104, %v1095
        %v1106 = vand.u32 %v1083, 65535
        %v1107 = vshrl.u32 %v1083, 16
        %v1108 = vand.u32 %v1078, 65535
        %v1109 = vshrl.u32 %v1078, 16
        %v1110 = vmul.u32 %v1106, %v1108
        %v1111 = vmul.u32 %v1106, %v1109
        %v1112 = vmul.u32 %v1107, %v1108
        %v1113 = vmul.u32 %v1107, %v1109
        %v1114 = vshll.u32 %v1111, 16
        %v1115 = vshrl.u32 %v1111, 16
        %v1116 = vshll.u32 %v1112, 16
        %v1117 = vshrl.u32 %v1112, 16
        %vm1118 = vc.u32 %v1110, %v1114
        %v1119 = vsel %vm1118, 1, 0
        %v1120 = vadd.s32 %v1110, %v1114
        %v1121 = vadd.s32 %v1113, %v1119
        %vm1122 = vc.u32 %v1120, %v1116
        %v1123 = vsel %vm1122, 1, 0
        %v1124 = vadd.s32 %v1120, %v1116
        %v1125 = vadd.s32 %v1121, %v1123
        %v1126 = vadd.s32 %v1125, %v1115
        %v1127 = vadd.s32 %v1126, %v1117
        %v1128 = vmul.u32 %v1083, %v1074
        %v1129 = vadd.s32 %v1105, %v1124
        %vm1130 = vc.u32 %v1105, %v1124
        %v1131 = vadd.s32 %v1127, 1
        %v1132 = vsel %vm1130, %v1131, %v1127
        %v1133 = vadd.s32 %v1128, %v1132
        %v1134 = vadd.s32 %v1133, 536870912
        %v1135 = vshrl.u32 %v1134, 30
        %v1136 = vshll.u32 %v1135, 30
        %v1137 = vsub.s32 %v1133, %v1136
        %vm1138 = vcmp.lt.s32.totalorder %v1137, 0
        %v1139 = vsub.s32 0, %v1137
        %v1140 = vsel %vm1138, %v1139, %v1137
        %v1141 = vclz %v1140
        %v1142 = vsub.s32 %v1141, 2
        %vm1143 = vcmp.gt.s32.totalorder 0, %v1142
        %v1144 = vsel %vm1143, 0, %v1142
        %v1145 = vsub.s32 32, %v1144
        %v1146 = vshll.u32 %v1137, %v1144
        %v1147 = vshrl.u32 %v1129, %v1145
        %v1148 = vor.u32 %v1146, %v1147
        %v1149 = vsub.s32 4294967266, %v1144
        %v1150 = vadd.s32 %v1149, 127
        %v1151 = vshll.u32 %v1150, 23
        %v1152 = vor.u32 4788187, %v1151
        %v1153 = vand.u32 2147483647, %v1152
        %v1155 = vcvt.s32.f32 %v1148
        %v1156 = vmul.f32 %v1155, %v1153
        %v1157 = vxor.u32 %v1156, 2147483648
        %v1158 = vsel %vm1037, %v1157, %v1156
        %v1159 = vsub.s32 4, %v1135
        %v1160 = vsel %vm1037, %v1159, %v1135
        %v1161 = vsel %vm1036, %v249, %v1158
        %v1162 = vsel %vm1036, 0, %v1160
        %v1163 = vmul.f32 %v1161, %v1161
        %v1164 = vmul.f32 %v1163, -0.001358992
        %v1165 = vadd.f32 %v1164, 0.041655596
        %v1166 = vmul.f32 %v1163, %v1165
        %v1167 = vadd.f32 %v1166, -0.4999988
        %v1168 = vmul.f32 %v1163, %v1167
        %v1169 = vadd.f32 1.0, %v1168
        %v1170 = vmul.f32 %v1161, %v1161
        %v1171 = vmul.f32 %v1170, -0.00019511016
        %v1172 = vadd.f32 %v1171, 0.008332121
        %v1173 = vmul.f32 %v1170, %v1172
        %v1174 = vadd.f32 %v1173, -0.16666654
        %v1175 = vmul.f32 %v1170, %v1174
        %v1176 = vadd.f32 %v1175, 1.0
        %v1177 = vmul.f32 %v1176, %v1161
        %vm1178 = vweird.f32 %v249
        %v1179 = vadd.s32 %v1162, 3
        %v1180 = vand.u32 %v1179, 3
        %vm1181 = vcmp.lt.s32.totalorder %v1180, 2
        %vm1182 = vcmp.eq.s32.totalorder %v1180, 0
        %v1183 = vxor.u32 %v1177, 2147483648
        %v1184 = vsel %vm1182, %v1169, %v1183
        %vm1185 = vcmp.eq.s32.totalorder %v1180, 2
        %v1186 = vxor.u32 %v1169, 2147483648
        %v1187 = vsel %vm1185, %v1186, %v1177
        %v1188 = vsel %vm1181, %v1184, %v1187
        %v1189 = vsel %vm1178, nan, %v1188
        %v1190 = vand.u32 2147483647, %v250
        %vm1191 = vcmp.le.f32.partialorder %v1190, 0.7853982
        %vm1192 = vcmp.lt.s32.totalorder %v250, 0
        %v1193 = vand.u32 %v250, 2139095040
        %v1194 = vshrl.u32 %v1193, 23
        %v1195 = vsub.s32 %v1194, 127
        %v1196 = vand.u32 2147483647, %v250
        %v1197 = vand.u32 %v1196, 8388607
        %v1198 = vor.u32 %v1197, 8388608
        %v1199 = vsub.s32 0, %v1198
        %v1200 = vadd.s32 %v1195, 1
        %vm1201 = vcmp.gt.s32.totalorder %v1200, 0
        %v1202 = vsel %vm1201, %v1200, 0
        %v1203 = vshrl.u32 %v1202, 5
        %v1204 = vand.u32 %v1202, 31
        %v1205 = vsub.s32 32, %v1204
        %v1206 = vshrl.u32 683565275, %v1205
        %v1207 = vshll.u32 683565275, %v1204
        %v1208 = vshrl.u32 2475754826, %v1205
        %v1209 = vor.u32 %v1207, %v1208
        %v1210 = vshll.u32 2475754826, %v1204
        %v1211 = vshrl.u32 2131351028, %v1205
        %v1212 = vor.u32 %v1210, %v1211
        %v1213 = vshll.u32 2131351028, %v1204
        %v1214 = vshrl.u32 2102212464, %v1205
        %v1215 = vor.u32 %v1213, %v1214
        %v1216 = vshll.u32 2102212464, %v1204
        %v1217 = vshrl.u32 920167782, %v1205
        %v1218 = vor.u32 %v1216, %v1217
        %v1219 = vshll.u32 920167782, %v1204
        %v1220 = vshrl.u32 1326507024, %v1205
        %v1221 = vor.u32 %v1219, %v1220
        %vm1222 = vcmp.lt.s32.totalorder %v1203, 1
        %vm1223 = vcmp.lt.s32.totalorder %v1203, 2
        %vm1224 = vcmp.lt.s32.totalorder %v1203, 3
        %vm1225 = vcmp.lt.s32.totalorder %v1203, 4
        %v1226 = vsel %vm1222, %v1206, %v1209
        %v1227 = vsel %vm1225, %v1215, 2102212464
        %v1228 = vsel %vm1224, %v1212, %v1227
        %v1229 = vsel %vm1223, %v1226, %v1228
        %v1230 = vsel %vm1222, %v1209, %v1212
        %v1231 = vsel %vm1225, %v1218, 920167782
        %v1232 = vsel %vm1224, %v1215, %v1231
        %v1233 = vsel %vm1223, %v1230, %v1232
        %v1234 = vsel %vm1222, %v1212, %v1215
        %v1235 = vsel %vm1225, %v1221, 1326507024
        %v1236 = vsel %vm1224, %v1218, %v1235
        %v1237 = vsel %vm1223, %v1234, %v1236
        %v1238 = vshll.u32 %v1198, 8
        %v1239 = vand.u32 %v1238, 65535
        %v1240 = vshrl.u32 %v1238, 16
        %v1241 = vand.u32 %v1237, 65535
        %v1242 = vshrl.u32 %v1237, 16
        %v1243 = vmul.u32 %v1239, %v1241
        %v1244 = vmul.u32 %v1239, %v1242
        %v1245 = vmul.u32 %v1240, %v1241
        %v1246 = vmul.u32 %v1240, %v1242
        %v1247 = vshll.u32 %v1244, 16
        %v1248 = vshrl.u32 %v1244, 16
        %v1249 = vshll.u32 %v1245, 16
        %v1250 = vshrl.u32 %v1245, 16
        %vm1251 = vc.u32 %v1243, %v1247
        %v1252 = vsel %vm1251, 1, 0
        %v1253 = vadd.s32 %v1243, %v1247
        %v1254 = vadd.s32 %v1246, %v1252
        %vm1255 = vc.u32 %v1253, %v1249
        %v1256 = vsel %vm1255, 1, 0
        %v1257 = vadd.s32 %v1253, %v1249
        %v1258 = vadd.s32 %v1254, %v1256
        %v1259 = vadd.s32 %v1258, %v1248
        %v1260 = vadd.s32 %v1259, %v1250
        %v1261 = vand.u32 %v1238, 65535
        %v1262 = vshrl.u32 %v1238, 16
        %v1263 = vand.u32 %v1233, 65535
        %v1264 = vshrl.u32 %v1233, 16
        %v1265 = vmul.u32 %v1261, %v1263
        %v1266 = vmul.u32 %v1261, %v1264
        %v1267 = vmul.u32 %v1262, %v1263
        %v1268 = vmul.u32 %v1262, %v1264
        %v1269 = vshll.u32 %v1266, 16
        %v1270 = vshrl.u32 %v1266, 16
        %v1271 = vshll.u32 %v1267, 16
        %v1272 = vshrl.u32 %v1267, 16
        %vm1273 = vc.u32 %v1265, %v1269
        %v1274 = vsel %vm1273, 1, 0
        %v1275 = vadd.s32 %v1265, %v1269
        %v1276 = vadd.s32 %v1268, %v1274
        %vm1277 = vc.u32 %v1275, %v1271
        %v1278 = vsel %vm1277, 1, 0
        %v1279 = vadd.s32 %v1275, %v1271
        %v1280 = vadd.s32 %v1276, %v1278
        %v1281 = vadd.s32 %v1280, %v1270
        %v1282 = vadd.s32 %v1281, %v1272
        %v1283 = vmul.u32 %v1238, %v1229
        %v1284 = vadd.s32 %v1260, %v1279
        %vm1285 = vc.u32 %v1260, %v1279
        %v1286 = vadd.s32 %v1282, 1
        %v1287 = vsel %vm1285, %v1286, %v1282
        %v1288 = vadd.s32 %v1283, %v1287
        %v1289 = vadd.s32 %v1288, 536870912
        %v1290 = vshrl.u32 %v1289, 30
        %v1291 = vshll.u32 %v1290, 30
        %v1292 = vsub.s32 %v1288, %v1291
        %vm1293 = vcmp.lt.s32.totalorder %v1292, 0
        %v1294 = vsub.s32 0, %v1292
        %v1295 = vsel %vm1293, %v1294, %v1292
        %v1296 = vclz %v1295
        %v1297 = vsub.s32 %v1296, 2
        %vm1298 = vcmp.gt.s32.totalorder 0, %v1297
        %v1299 = vsel %vm1298, 0, %v1297
        %v1300 = vsub.s32 32, %v1299
        %v1301 = vshll.u32 %v1292, %v1299
        %v1302 = vshrl.u32 %v1284, %v1300
        %v1303 = vor.u32 %v1301, %v1302
        %v1304 = vsub.s32 4294967266, %v1299
        %v1305 = vadd.s32 %v1304, 127
        %v1306 = vshll.u32 %v1305, 23
        %v1307 = vor.u32 4788187, %v1306
        %v1308 = vand.u32 2147483647, %v1307
        %v1310 = vcvt.s32.f32 %v1303
        %v1311 = vmul.f32 %v1310, %v1308
        %v1312 = vxor.u32 %v1311, 2147483648
        %v1313 = vsel %vm1192, %v1312, %v1311
        %v1314 = vsub.s32 4, %v1290
        %v1315 = vsel %vm1192, %v1314, %v1290
        %v1316 = vsel %vm1191, %v250, %v1313
        %v1317 = vsel %vm1191, 0, %v1315
        %v1318 = vmul.f32 %v1316, %v1316
        %v1319 = vmul.f32 %v1318, -0.001358992
        %v1320 = vadd.f32 %v1319, 0.041655596
        %v1321 = vmul.f32 %v1318, %v1320
        %v1322 = vadd.f32 %v1321, -0.4999988
        %v1323 = vmul.f32 %v1318, %v1322
        %v1324 = vadd.f32 1.0, %v1323
        %v1325 = vmul.f32 %v1316, %v1316
        %v1326 = vmul.f32 %v1325, -0.00019511016
        %v1327 = vadd.f32 %v1326, 0.008332121
        %v1328 = vmul.f32 %v1325, %v1327
        %v1329 = vadd.f32 %v1328, -0.16666654
        %v1330 = vmul.f32 %v1325, %v1329
        %v1331 = vadd.f32 %v1330, 1.0
        %v1332 = vmul.f32 %v1331, %v1316
        %vm1333 = vweird.f32 %v250
        %v1334 = vadd.s32 %v1317, 3
        %v1335 = vand.u32 %v1334, 3
        %vm1336 = vcmp.lt.s32.totalorder %v1335, 2
        %vm1337 = vcmp.eq.s32.totalorder %v1335, 0
        %v1338 = vxor.u32 %v1332, 2147483648
        %v1339 = vsel %vm1337, %v1324, %v1338
        %vm1340 = vcmp.eq.s32.totalorder %v1335, 2
        %v1341 = vxor.u32 %v1324, 2147483648
        %v1342 = vsel %vm1340, %v1341, %v1332
        %v1343 = vsel %vm1336, %v1339, %v1342
        %v1344 = vsel %vm1333, nan, %v1343
        %v1345 = vand.u32 2147483647, %v251
        %vm1346 = vcmp.le.f32.partialorder %v1345, 0.7853982
        %vm1347 = vcmp.lt.s32.totalorder %v251, 0
        %v1348 = vand.u32 %v251, 2139095040
        %v1349 = vshrl.u32 %v1348, 23
        %v1350 = vsub.s32 %v1349, 127
        %v1351 = vand.u32 2147483647, %v251
        %v1352 = vand.u32 %v1351, 8388607
        %v1353 = vor.u32 %v1352, 8388608
        %v1354 = vsub.s32 0, %v1353
        %v1355 = vadd.s32 %v1350, 1
        %vm1356 = vcmp.gt.s32.totalorder %v1355, 0
        %v1357 = vsel %vm1356, %v1355, 0
        %v1358 = vshrl.u32 %v1357, 5
        %v1359 = vand.u32 %v1357, 31
        %v1360 = vsub.s32 32, %v1359
        %v1361 = vshrl.u32 683565275, %v1360
        %v1362 = vshll.u32 683565275, %v1359
        %v1363 = vshrl.u32 2475754826, %v1360
        %v1364 = vor.u32 %v1362, %v1363
        %v1365 = vshll.u32 2475754826, %v1359
        %v1366 = vshrl.u32 2131351028, %v1360
        %v1367 = vor.u32 %v1365, %v1366
        %v1368 = vshll.u32 2131351028, %v1359
        %v1369 = vshrl.u32 2102212464, %v1360
        %v1370 = vor.u32 %v1368, %v1369
        %v1371 = vshll.u32 2102212464, %v1359
        %v1372 = vshrl.u32 920167782, %v1360
        %v1373 = vor.u32 %v1371, %v1372
        %v1374 = vshll.u32 920167782, %v1359
        %v1375 = vshrl.u32 1326507024, %v1360
        %v1376 = vor.u32 %v1374, %v1375
        %vm1377 = vcmp.lt.s32.totalorder %v1358, 1
        %vm1378 = vcmp.lt.s32.totalorder %v1358, 2
        %vm1379 = vcmp.lt.s32.totalorder %v1358, 3
        %vm1380 = vcmp.lt.s32.totalorder %v1358, 4
        %v1381 = vsel %vm1377, %v1361, %v1364
        %v1382 = vsel %vm1380, %v1370, 2102212464
        %v1383 = vsel %vm1379, %v1367, %v1382
        %v1384 = vsel %vm1378, %v1381, %v1383
        %v1385 = vsel %vm1377, %v1364, %v1367
        %v1386 = vsel %vm1380, %v1373, 920167782
        %v1387 = vsel %vm1379, %v1370, %v1386
        %v1388 = vsel %vm1378, %v1385, %v1387
        %v1389 = vsel %vm1377, %v1367, %v1370
        %v1390 = vsel %vm1380, %v1376, 1326507024
        %v1391 = vsel %vm1379, %v1373, %v1390
        %v1392 = vsel %vm1378, %v1389, %v1391
        %v1393 = vshll.u32 %v1353, 8
        %v1394 = vand.u32 %v1393, 65535
        %v1395 = vshrl.u32 %v1393, 16
        %v1396 = vand.u32 %v1392, 65535
        %v1397 = vshrl.u32 %v1392, 16
        %v1398 = vmul.u32 %v1394, %v1396
        %v1399 = vmul.u32 %v1394, %v1397
        %v1400 = vmul.u32 %v1395, %v1396
        %v1401 = vmul.u32 %v1395, %v1397
        %v1402 = vshll.u32 %v1399, 16
        %v1403 = vshrl.u32 %v1399, 16
        %v1404 = vshll.u32 %v1400, 16
        %v1405 = vshrl.u32 %v1400, 16
        %vm1406 = vc.u32 %v1398, %v1402
        %v1407 = vsel %vm1406, 1, 0
        %v1408 = vadd.s32 %v1398, %v1402
        %v1409 = vadd.s32 %v1401, %v1407
        %vm1410 = vc.u32 %v1408, %v1404
        %v1411 = vsel %vm1410, 1, 0
        %v1412 = vadd.s32 %v1408, %v1404
        %v1413 = vadd.s32 %v1409, %v1411
        %v1414 = vadd.s32 %v1413, %v1403
        %v1415 = vadd.s32 %v1414, %v1405
        %v1416 = vand.u32 %v1393, 65535
        %v1417 = vshrl.u32 %v1393, 16
        %v1418 = vand.u32 %v1388, 65535
        %v1419 = vshrl.u32 %v1388, 16
        %v1420 = vmul.u32 %v1416, %v1418
        %v1421 = vmul.u32 %v1416, %v1419
        %v1422 = vmul.u32 %v1417, %v1418
        %v1423 = vmul.u32 %v1417, %v1419
        %v1424 = vshll.u32 %v1421, 16
        %v1425 = vshrl.u32 %v1421, 16
        %v1426 = vshll.u32 %v1422, 16
        %v1427 = vshrl.u32 %v1422, 16
        %vm1428 = vc.u32 %v1420, %v1424
        %v1429 = vsel %vm1428, 1, 0
        %v1430 = vadd.s32 %v1420, %v1424
        %v1431 = vadd.s32 %v1423, %v1429
        %vm1432 = vc.u32 %v1430, %v1426
        %v1433 = vsel %vm1432, 1, 0
        %v1434 = vadd.s32 %v1430, %v1426
        %v1435 = vadd.s32 %v1431, %v1433
        %v1436 = vadd.s32 %v1435, %v1425
        %v1437 = vadd.s32 %v1436, %v1427
        %v1438 = vmul.u32 %v1393, %v1384
        %v1439 = vadd.s32 %v1415, %v1434
        %vm1440 = vc.u32 %v1415, %v1434
        %v1441 = vadd.s32 %v1437, 1
        %v1442 = vsel %vm1440, %v1441, %v1437
        %v1443 = vadd.s32 %v1438, %v1442
        %v1444 = vadd.s32 %v1443, 536870912
        %v1445 = vshrl.u32 %v1444, 30
        %v1446 = vshll.u32 %v1445, 30
        %v1447 = vsub.s32 %v1443, %v1446
        %vm1448 = vcmp.lt.s32.totalorder %v1447, 0
        %v1449 = vsub.s32 0, %v1447
        %v1450 = vsel %vm1448, %v1449, %v1447
        %v1451 = vclz %v1450
        %v1452 = vsub.s32 %v1451, 2
        %vm1453 = vcmp.gt.s32.totalorder 0, %v1452
        %v1454 = vsel %vm1453, 0, %v1452
        %v1455 = vsub.s32 32, %v1454
        %v1456 = vshll.u32 %v1447, %v1454
        %v1457 = vshrl.u32 %v1439, %v1455
        %v1458 = vor.u32 %v1456, %v1457
        %v1459 = vsub.s32 4294967266, %v1454
        %v1460 = vadd.s32 %v1459, 127
        %v1461 = vshll.u32 %v1460, 23
        %v1462 = vor.u32 4788187, %v1461
        %v1463 = vand.u32 2147483647, %v1462
        %v1465 = vcvt.s32.f32 %v1458
        %v1466 = vmul.f32 %v1465, %v1463
        %v1467 = vxor.u32 %v1466, 2147483648
        %v1468 = vsel %vm1347, %v1467, %v1466
        %v1469 = vsub.s32 4, %v1445
        %v1470 = vsel %vm1347, %v1469, %v1445
        %v1471 = vsel %vm1346, %v251, %v1468
        %v1472 = vsel %vm1346, 0, %v1470
        %v1473 = vmul.f32 %v1471, %v1471
        %v1474 = vmul.f32 %v1473, -0.001358992
        %v1475 = vadd.f32 %v1474, 0.041655596
        %v1476 = vmul.f32 %v1473, %v1475
        %v1477 = vadd.f32 %v1476, -0.4999988
        %v1478 = vmul.f32 %v1473, %v1477
        %v1479 = vadd.f32 1.0, %v1478
        %v1480 = vmul.f32 %v1471, %v1471
        %v1481 = vmul.f32 %v1480, -0.00019511016
        %v1482 = vadd.f32 %v1481, 0.008332121
        %v1483 = vmul.f32 %v1480, %v1482
        %v1484 = vadd.f32 %v1483, -0.16666654
        %v1485 = vmul.f32 %v1480, %v1484
        %v1486 = vadd.f32 %v1485, 1.0
        %v1487 = vmul.f32 %v1486, %v1471
        %vm1488 = vweird.f32 %v251
        %v1489 = vadd.s32 %v1472, 3
        %v1490 = vand.u32 %v1489, 3
        %vm1491 = vcmp.lt.s32.totalorder %v1490, 2
        %vm1492 = vcmp.eq.s32.totalorder %v1490, 0
        %v1493 = vxor.u32 %v1487, 2147483648
        %v1494 = vsel %vm1492, %v1479, %v1493
        %vm1495 = vcmp.eq.s32.totalorder %v1490, 2
        %v1496 = vxor.u32 %v1479, 2147483648
        %v1497 = vsel %vm1495, %v1496, %v1487
        %v1498 = vsel %vm1491, %v1494, %v1497
        %v1499 = vsel %vm1488, nan, %v1498
        %v1500 = vand.u32 2147483647, %v252
        %vm1501 = vcmp.le.f32.partialorder %v1500, 0.7853982
        %vm1502 = vcmp.lt.s32.totalorder %v252, 0
        %v1503 = vand.u32 %v252, 2139095040
        %v1504 = vshrl.u32 %v1503, 23
        %v1505 = vsub.s32 %v1504, 127
        %v1506 = vand.u32 2147483647, %v252
        %v1507 = vand.u32 %v1506, 8388607
        %v1508 = vor.u32 %v1507, 8388608
        %v1509 = vsub.s32 0, %v1508
        %v1510 = vadd.s32 %v1505, 1
        %vm1511 = vcmp.gt.s32.totalorder %v1510, 0
        %v1512 = vsel %vm1511, %v1510, 0
        %v1513 = vshrl.u32 %v1512, 5
        %v1514 = vand.u32 %v1512, 31
        %v1515 = vsub.s32 32, %v1514
        %v1516 = vshrl.u32 683565275, %v1515
        %v1517 = vshll.u32 683565275, %v1514
        %v1518 = vshrl.u32 2475754826, %v1515
        %v1519 = vor.u32 %v1517, %v1518
        %v1520 = vshll.u32 2475754826, %v1514
        %v1521 = vshrl.u32 2131351028, %v1515
        %v1522 = vor.u32 %v1520, %v1521
        %v1523 = vshll.u32 2131351028, %v1514
        %v1524 = vshrl.u32 2102212464, %v1515
        %v1525 = vor.u32 %v1523, %v1524
        %v1526 = vshll.u32 2102212464, %v1514
        %v1527 = vshrl.u32 920167782, %v1515
        %v1528 = vor.u32 %v1526, %v1527
        %v1529 = vshll.u32 920167782, %v1514
        %v1530 = vshrl.u32 1326507024, %v1515
        %v1531 = vor.u32 %v1529, %v1530
        %vm1532 = vcmp.lt.s32.totalorder %v1513, 1
        %vm1533 = vcmp.lt.s32.totalorder %v1513, 2
        %vm1534 = vcmp.lt.s32.totalorder %v1513, 3
        %vm1535 = vcmp.lt.s32.totalorder %v1513, 4
        %v1536 = vsel %vm1532, %v1516, %v1519
        %v1537 = vsel %vm1535, %v1525, 2102212464
        %v1538 = vsel %vm1534, %v1522, %v1537
        %v1539 = vsel %vm1533, %v1536, %v1538
        %v1540 = vsel %vm1532, %v1519, %v1522
        %v1541 = vsel %vm1535, %v1528, 920167782
        %v1542 = vsel %vm1534, %v1525, %v1541
        %v1543 = vsel %vm1533, %v1540, %v1542
        %v1544 = vsel %vm1532, %v1522, %v1525
        %v1545 = vsel %vm1535, %v1531, 1326507024
        %v1546 = vsel %vm1534, %v1528, %v1545
        %v1547 = vsel %vm1533, %v1544, %v1546
        %v1548 = vshll.u32 %v1508, 8
        %v1549 = vand.u32 %v1548, 65535
        %v1550 = vshrl.u32 %v1548, 16
        %v1551 = vand.u32 %v1547, 65535
        %v1552 = vshrl.u32 %v1547, 16
        %v1553 = vmul.u32 %v1549, %v1551
        %v1554 = vmul.u32 %v1549, %v1552
        %v1555 = vmul.u32 %v1550, %v1551
        %v1556 = vmul.u32 %v1550, %v1552
        %v1557 = vshll.u32 %v1554, 16
        %v1558 = vshrl.u32 %v1554, 16
        %v1559 = vshll.u32 %v1555, 16
        %v1560 = vshrl.u32 %v1555, 16
        %vm1561 = vc.u32 %v1553, %v1557
        %v1562 = vsel %vm1561, 1, 0
        %v1563 = vadd.s32 %v1553, %v1557
        %v1564 = vadd.s32 %v1556, %v1562
        %vm1565 = vc.u32 %v1563, %v1559
        %v1566 = vsel %vm1565, 1, 0
        %v1567 = vadd.s32 %v1563, %v1559
        %v1568 = vadd.s32 %v1564, %v1566
        %v1569 = vadd.s32 %v1568, %v1558
        %v1570 = vadd.s32 %v1569, %v1560
        %v1571 = vand.u32 %v1548, 65535
        %v1572 = vshrl.u32 %v1548, 16
        %v1573 = vand.u32 %v1543, 65535
        %v1574 = vshrl.u32 %v1543, 16
        %v1575 = vmul.u32 %v1571, %v1573
        %v1576 = vmul.u32 %v1571, %v1574
        %v1577 = vmul.u32 %v1572, %v1573
        %v1578 = vmul.u32 %v1572, %v1574
        %v1579 = vshll.u32 %v1576, 16
        %v1580 = vshrl.u32 %v1576, 16
        %v1581 = vshll.u32 %v1577, 16
        %v1582 = vshrl.u32 %v1577, 16
        %vm1583 = vc.u32 %v1575, %v1579
        %v1584 = vsel %vm1583, 1, 0
        %v1585 = vadd.s32 %v1575, %v1579
        %v1586 = vadd.s32 %v1578, %v1584
        %vm1587 = vc.u32 %v1585, %v1581
        %v1588 = vsel %vm1587, 1, 0
        %v1589 = vadd.s32 %v1585, %v1581
        %v1590 = vadd.s32 %v1586, %v1588
        %v1591 = vadd.s32 %v1590, %v1580
        %v1592 = vadd.s32 %v1591, %v1582
        %v1593 = vmul.u32 %v1548, %v1539
        %v1594 = vadd.s32 %v1570, %v1589
        %vm1595 = vc.u32 %v1570, %v1589
        %v1596 = vadd.s32 %v1592, 1
        %v1597 = vsel %vm1595, %v1596, %v1592
        %v1598 = vadd.s32 %v1593, %v1597
        %v1599 = vadd.s32 %v1598, 536870912
        %v1600 = vshrl.u32 %v1599, 30
        %v1601 = vshll.u32 %v1600, 30
        %v1602 = vsub.s32 %v1598, %v1601
        %vm1603 = vcmp.lt.s32.totalorder %v1602, 0
        %v1604 = vsub.s32 0, %v1602
        %v1605 = vsel %vm1603, %v1604, %v1602
        %v1606 = vclz %v1605
        %v1607 = vsub.s32 %v1606, 2
        %vm1608 = vcmp.gt.s32.totalorder 0, %v1607
        %v1609 = vsel %vm1608, 0, %v1607
        %v1610 = vsub.s32 32, %v1609
        %v1611 = vshll.u32 %v1602, %v1609
        %v1612 = vshrl.u32 %v1594, %v1610
        %v1613 = vor.u32 %v1611, %v1612
        %v1614 = vsub.s32 4294967266, %v1609
        %v1615 = vadd.s32 %v1614, 127
        %v1616 = vshll.u32 %v1615, 23
        %v1617 = vor.u32 4788187, %v1616
        %v1618 = vand.u32 2147483647, %v1617
        %v1620 = vcvt.s32.f32 %v1613
        %v1621 = vmul.f32 %v1620, %v1618
        %v1622 = vxor.u32 %v1621, 2147483648
        %v1623 = vsel %vm1502, %v1622, %v1621
        %v1624 = vsub.s32 4, %v1600
        %v1625 = vsel %vm1502, %v1624, %v1600
        %v1626 = vsel %vm1501, %v252, %v1623
        %v1627 = vsel %vm1501, 0, %v1625
        %v1628 = vmul.f32 %v1626, %v1626
        %v1629 = vmul.f32 %v1628, -0.001358992
        %v1630 = vadd.f32 %v1629, 0.041655596
        %v1631 = vmul.f32 %v1628, %v1630
        %v1632 = vadd.f32 %v1631, -0.4999988
        %v1633 = vmul.f32 %v1628, %v1632
        %v1634 = vadd.f32 1.0, %v1633
        %v1635 = vmul.f32 %v1626, %v1626
        %v1636 = vmul.f32 %v1635, -0.00019511016
        %v1637 = vadd.f32 %v1636, 0.008332121
        %v1638 = vmul.f32 %v1635, %v1637
        %v1639 = vadd.f32 %v1638, -0.16666654
        %v1640 = vmul.f32 %v1635, %v1639
        %v1641 = vadd.f32 %v1640, 1.0
        %v1642 = vmul.f32 %v1641, %v1626
        %vm1643 = vweird.f32 %v252
        %v1644 = vadd.s32 %v1627, 3
        %v1645 = vand.u32 %v1644, 3
        %vm1646 = vcmp.lt.s32.totalorder %v1645, 2
        %vm1647 = vcmp.eq.s32.totalorder %v1645, 0
        %v1648 = vxor.u32 %v1642, 2147483648
        %v1649 = vsel %vm1647, %v1634, %v1648
        %vm1650 = vcmp.eq.s32.totalorder %v1645, 2
        %v1651 = vxor.u32 %v1634, 2147483648
        %v1652 = vsel %vm1650, %v1651, %v1642
        %v1653 = vsel %vm1646, %v1649, %v1652
        %v1654 = vsel %vm1643, nan, %v1653
        %v1655 = vand.u32 2147483647, %v253
        %vm1656 = vcmp.le.f32.partialorder %v1655, 0.7853982
        %vm1657 = vcmp.lt.s32.totalorder %v253, 0
        %v1658 = vand.u32 %v253, 2139095040
        %v1659 = vshrl.u32 %v1658, 23
        %v1660 = vsub.s32 %v1659, 127
        %v1661 = vand.u32 2147483647, %v253
        %v1662 = vand.u32 %v1661, 8388607
        %v1663 = vor.u32 %v1662, 8388608
        %v1664 = vsub.s32 0, %v1663
        %v1665 = vadd.s32 %v1660, 1
        %vm1666 = vcmp.gt.s32.totalorder %v1665, 0
        %v1667 = vsel %vm1666, %v1665, 0
        %v1668 = vshrl.u32 %v1667, 5
        %v1669 = vand.u32 %v1667, 31
        %v1670 = vsub.s32 32, %v1669
        %v1671 = vshrl.u32 683565275, %v1670
        %v1672 = vshll.u32 683565275, %v1669
        %v1673 = vshrl.u32 2475754826, %v1670
        %v1674 = vor.u32 %v1672, %v1673
        %v1675 = vshll.u32 2475754826, %v1669
        %v1676 = vshrl.u32 2131351028, %v1670
        %v1677 = vor.u32 %v1675, %v1676
        %v1678 = vshll.u32 2131351028, %v1669
        %v1679 = vshrl.u32 2102212464, %v1670
        %v1680 = vor.u32 %v1678, %v1679
        %v1681 = vshll.u32 2102212464, %v1669
        %v1682 = vshrl.u32 920167782, %v1670
        %v1683 = vor.u32 %v1681, %v1682
        %v1684 = vshll.u32 920167782, %v1669
        %v1685 = vshrl.u32 1326507024, %v1670
        %v1686 = vor.u32 %v1684, %v1685
        %vm1687 = vcmp.lt.s32.totalorder %v1668, 1
        %vm1688 = vcmp.lt.s32.totalorder %v1668, 2
        %vm1689 = vcmp.lt.s32.totalorder %v1668, 3
        %vm1690 = vcmp.lt.s32.totalorder %v1668, 4
        %v1691 = vsel %vm1687, %v1671, %v1674
        %v1692 = vsel %vm1690, %v1680, 2102212464
        %v1693 = vsel %vm1689, %v1677, %v1692
        %v1694 = vsel %vm1688, %v1691, %v1693
        %v1695 = vsel %vm1687, %v1674, %v1677
        %v1696 = vsel %vm1690, %v1683, 920167782
        %v1697 = vsel %vm1689, %v1680, %v1696
        %v1698 = vsel %vm1688, %v1695, %v1697
        %v1699 = vsel %vm1687, %v1677, %v1680
        %v1700 = vsel %vm1690, %v1686, 1326507024
        %v1701 = vsel %vm1689, %v1683, %v1700
        %v1702 = vsel %vm1688, %v1699, %v1701
        %v1703 = vshll.u32 %v1663, 8
        %v1704 = vand.u32 %v1703, 65535
        %v1705 = vshrl.u32 %v1703, 16
        %v1706 = vand.u32 %v1702, 65535
        %v1707 = vshrl.u32 %v1702, 16
        %v1708 = vmul.u32 %v1704, %v1706
        %v1709 = vmul.u32 %v1704, %v1707
        %v1710 = vmul.u32 %v1705, %v1706
        %v1711 = vmul.u32 %v1705, %v1707
        %v1712 = vshll.u32 %v1709, 16
        %v1713 = vshrl.u32 %v1709, 16
        %v1714 = vshll.u32 %v1710, 16
        %v1715 = vshrl.u32 %v1710, 16
        %vm1716 = vc.u32 %v1708, %v1712
        %v1717 = vsel %vm1716, 1, 0
        %v1718 = vadd.s32 %v1708, %v1712
        %v1719 = vadd.s32 %v1711, %v1717
        %vm1720 = vc.u32 %v1718, %v1714
        %v1721 = vsel %vm1720, 1, 0
        %v1722 = vadd.s32 %v1718, %v1714
        %v1723 = vadd.s32 %v1719, %v1721
        %v1724 = vadd.s32 %v1723, %v1713
        %v1725 = vadd.s32 %v1724, %v1715
        %v1726 = vand.u32 %v1703, 65535
        %v1727 = vshrl.u32 %v1703, 16
        %v1728 = vand.u32 %v1698, 65535
        %v1729 = vshrl.u32 %v1698, 16
        %v1730 = vmul.u32 %v1726, %v1728
        %v1731 = vmul.u32 %v1726, %v1729
        %v1732 = vmul.u32 %v1727, %v1728
        %v1733 = vmul.u32 %v1727, %v1729
        %v1734 = vshll.u32 %v1731, 16
        %v1735 = vshrl.u32 %v1731, 16
        %v1736 = vshll.u32 %v1732, 16
        %v1737 = vshrl.u32 %v1732, 16
        %vm1738 = vc.u32 %v1730, %v1734
        %v1739 = vsel %vm1738, 1, 0
        %v1740 = vadd.s32 %v1730, %v1734
        %v1741 = vadd.s32 %v1733, %v1739
        %vm1742 = vc.u32 %v1740, %v1736
        %v1743 = vsel %vm1742, 1, 0
        %v1744 = vadd.s32 %v1740, %v1736
        %v1745 = vadd.s32 %v1741, %v1743
        %v1746 = vadd.s32 %v1745, %v1735
        %v1747 = vadd.s32 %v1746, %v1737
        %v1748 = vmul.u32 %v1703, %v1694
        %v1749 = vadd.s32 %v1725, %v1744
        %vm1750 = vc.u32 %v1725, %v1744
        %v1751 = vadd.s32 %v1747, 1
        %v1752 = vsel %vm1750, %v1751, %v1747
        %v1753 = vadd.s32 %v1748, %v1752
        %v1754 = vadd.s32 %v1753, 536870912
        %v1755 = vshrl.u32 %v1754, 30
        %v1756 = vshll.u32 %v1755, 30
        %v1757 = vsub.s32 %v1753, %v1756
        %vm1758 = vcmp.lt.s32.totalorder %v1757, 0
        %v1759 = vsub.s32 0, %v1757
        %v1760 = vsel %vm1758, %v1759, %v1757
        %v1761 = vclz %v1760
        %v1762 = vsub.s32 %v1761, 2
        %vm1763 = vcmp.gt.s32.totalorder 0, %v1762
        %v1764 = vsel %vm1763, 0, %v1762
        %v1765 = vsub.s32 32, %v1764
        %v1766 = vshll.u32 %v1757, %v1764
        %v1767 = vshrl.u32 %v1749, %v1765
        %v1768 = vor.u32 %v1766, %v1767
        %v1769 = vsub.s32 4294967266, %v1764
        %v1770 = vadd.s32 %v1769, 127
        %v1771 = vshll.u32 %v1770, 23
        %v1772 = vor.u32 4788187, %v1771
        %v1773 = vand.u32 2147483647, %v1772
        %v1775 = vcvt.s32.f32 %v1768
        %v1776 = vmul.f32 %v1775, %v1773
        %v1777 = vxor.u32 %v1776, 2147483648
        %v1778 = vsel %vm1657, %v1777, %v1776
        %v1779 = vsub.s32 4, %v1755
        %v1780 = vsel %vm1657, %v1779, %v1755
        %v1781 = vsel %vm1656, %v253, %v1778
        %v1782 = vsel %vm1656, 0, %v1780
        %v1783 = vmul.f32 %v1781, %v1781
        %v1784 = vmul.f32 %v1783, -0.001358992
        %v1785 = vadd.f32 %v1784, 0.041655596
        %v1786 = vmul.f32 %v1783, %v1785
        %v1787 = vadd.f32 %v1786, -0.4999988
        %v1788 = vmul.f32 %v1783, %v1787
        %v1789 = vadd.f32 1.0, %v1788
        %v1790 = vmul.f32 %v1781, %v1781
        %v1791 = vmul.f32 %v1790, -0.00019511016
        %v1792 = vadd.f32 %v1791, 0.008332121
        %v1793 = vmul.f32 %v1790, %v1792
        %v1794 = vadd.f32 %v1793, -0.16666654
        %v1795 = vmul.f32 %v1790, %v1794
        %v1796 = vadd.f32 %v1795, 1.0
        %v1797 = vmul.f32 %v1796, %v1781
        %vm1798 = vweird.f32 %v253
        %v1799 = vadd.s32 %v1782, 3
        %v1800 = vand.u32 %v1799, 3
        %vm1801 = vcmp.lt.s32.totalorder %v1800, 2
        %vm1802 = vcmp.eq.s32.totalorder %v1800, 0
        %v1803 = vxor.u32 %v1797, 2147483648
        %v1804 = vsel %vm1802, %v1789, %v1803
        %vm1805 = vcmp.eq.s32.totalorder %v1800, 2
        %v1806 = vxor.u32 %v1789, 2147483648
        %v1807 = vsel %vm1805, %v1806, %v1797
        %v1808 = vsel %vm1801, %v1804, %v1807
        %v1809 = vsel %vm1798, nan, %v1808
        %v1810 = vand.u32 2147483647, %v254
        %vm1811 = vcmp.le.f32.partialorder %v1810, 0.7853982
        %vm1812 = vcmp.lt.s32.totalorder %v254, 0
        %v1813 = vand.u32 %v254, 2139095040
        %v1814 = vshrl.u32 %v1813, 23
        %v1815 = vsub.s32 %v1814, 127
        %v1816 = vand.u32 2147483647, %v254
        %v1817 = vand.u32 %v1816, 8388607
        %v1818 = vor.u32 %v1817, 8388608
        %v1819 = vsub.s32 0, %v1818
        %v1820 = vadd.s32 %v1815, 1
        %vm1821 = vcmp.gt.s32.totalorder %v1820, 0
        %v1822 = vsel %vm1821, %v1820, 0
        %v1823 = vshrl.u32 %v1822, 5
        %v1824 = vand.u32 %v1822, 31
        %v1825 = vsub.s32 32, %v1824
        %v1826 = vshrl.u32 683565275, %v1825
        %v1827 = vshll.u32 683565275, %v1824
        %v1828 = vshrl.u32 2475754826, %v1825
        %v1829 = vor.u32 %v1827, %v1828
        %v1830 = vshll.u32 2475754826, %v1824
        %v1831 = vshrl.u32 2131351028, %v1825
        %v1832 = vor.u32 %v1830, %v1831
        %v1833 = vshll.u32 2131351028, %v1824
        %v1834 = vshrl.u32 2102212464, %v1825
        %v1835 = vor.u32 %v1833, %v1834
        %v1836 = vshll.u32 2102212464, %v1824
        %v1837 = vshrl.u32 920167782, %v1825
        %v1838 = vor.u32 %v1836, %v1837
        %v1839 = vshll.u32 920167782, %v1824
        %v1840 = vshrl.u32 1326507024, %v1825
        %v1841 = vor.u32 %v1839, %v1840
        %vm1842 = vcmp.lt.s32.totalorder %v1823, 1
        %vm1843 = vcmp.lt.s32.totalorder %v1823, 2
        %vm1844 = vcmp.lt.s32.totalorder %v1823, 3
        %vm1845 = vcmp.lt.s32.totalorder %v1823, 4
        %v1846 = vsel %vm1842, %v1826, %v1829
        %v1847 = vsel %vm1845, %v1835, 2102212464
        %v1848 = vsel %vm1844, %v1832, %v1847
        %v1849 = vsel %vm1843, %v1846, %v1848
        %v1850 = vsel %vm1842, %v1829, %v1832
        %v1851 = vsel %vm1845, %v1838, 920167782
        %v1852 = vsel %vm1844, %v1835, %v1851
        %v1853 = vsel %vm1843, %v1850, %v1852
        %v1854 = vsel %vm1842, %v1832, %v1835
        %v1855 = vsel %vm1845, %v1841, 1326507024
        %v1856 = vsel %vm1844, %v1838, %v1855
        %v1857 = vsel %vm1843, %v1854, %v1856
        %v1858 = vshll.u32 %v1818, 8
        %v1859 = vand.u32 %v1858, 65535
        %v1860 = vshrl.u32 %v1858, 16
        %v1861 = vand.u32 %v1857, 65535
        %v1862 = vshrl.u32 %v1857, 16
        %v1863 = vmul.u32 %v1859, %v1861
        %v1864 = vmul.u32 %v1859, %v1862
        %v1865 = vmul.u32 %v1860, %v1861
        %v1866 = vmul.u32 %v1860, %v1862
        %v1867 = vshll.u32 %v1864, 16
        %v1868 = vshrl.u32 %v1864, 16
        %v1869 = vshll.u32 %v1865, 16
        %v1870 = vshrl.u32 %v1865, 16
        %vm1871 = vc.u32 %v1863, %v1867
        %v1872 = vsel %vm1871, 1, 0
        %v1873 = vadd.s32 %v1863, %v1867
        %v1874 = vadd.s32 %v1866, %v1872
        %vm1875 = vc.u32 %v1873, %v1869
        %v1876 = vsel %vm1875, 1, 0
        %v1877 = vadd.s32 %v1873, %v1869
        %v1878 = vadd.s32 %v1874, %v1876
        %v1879 = vadd.s32 %v1878, %v1868
        %v1880 = vadd.s32 %v1879, %v1870
        %v1881 = vand.u32 %v1858, 65535
        %v1882 = vshrl.u32 %v1858, 16
        %v1883 = vand.u32 %v1853, 65535
        %v1884 = vshrl.u32 %v1853, 16
        %v1885 = vmul.u32 %v1881, %v1883
        %v1886 = vmul.u32 %v1881, %v1884
        %v1887 = vmul.u32 %v1882, %v1883
        %v1888 = vmul.u32 %v1882, %v1884
        %v1889 = vshll.u32 %v1886, 16
        %v1890 = vshrl.u32 %v1886, 16
        %v1891 = vshll.u32 %v1887, 16
        %v1892 = vshrl.u32 %v1887, 16
        %vm1893 = vc.u32 %v1885, %v1889
        %v1894 = vsel %vm1893, 1, 0
        %v1895 = vadd.s32 %v1885, %v1889
        %v1896 = vadd.s32 %v1888, %v1894
        %vm1897 = vc.u32 %v1895, %v1891
        %v1898 = vsel %vm1897, 1, 0
        %v1899 = vadd.s32 %v1895, %v1891
        %v1900 = vadd.s32 %v1896, %v1898
        %v1901 = vadd.s32 %v1900, %v1890
        %v1902 = vadd.s32 %v1901, %v1892
        %v1903 = vmul.u32 %v1858, %v1849
        %v1904 = vadd.s32 %v1880, %v1899
        %vm1905 = vc.u32 %v1880, %v1899
        %v1906 = vadd.s32 %v1902, 1
        %v1907 = vsel %vm1905, %v1906, %v1902
        %v1908 = vadd.s32 %v1903, %v1907
        %v1909 = vadd.s32 %v1908, 536870912
        %v1910 = vshrl.u32 %v1909, 30
        %v1911 = vshll.u32 %v1910, 30
        %v1912 = vsub.s32 %v1908, %v1911
        %vm1913 = vcmp.lt.s32.totalorder %v1912, 0
        %v1914 = vsub.s32 0, %v1912
        %v1915 = vsel %vm1913, %v1914, %v1912
        %v1916 = vclz %v1915
        %v1917 = vsub.s32 %v1916, 2
        %vm1918 = vcmp.gt.s32.totalorder 0, %v1917
        %v1919 = vsel %vm1918, 0, %v1917
        %v1920 = vsub.s32 32, %v1919
        %v1921 = vshll.u32 %v1912, %v1919
        %v1922 = vshrl.u32 %v1904, %v1920
        %v1923 = vor.u32 %v1921, %v1922
        %v1924 = vsub.s32 4294967266, %v1919
        %v1925 = vadd.s32 %v1924, 127
        %v1926 = vshll.u32 %v1925, 23
        %v1927 = vor.u32 4788187, %v1926
        %v1928 = vand.u32 2147483647, %v1927
        %v1930 = vcvt.s32.f32 %v1923
        %v1931 = vmul.f32 %v1930, %v1928
        %v1932 = vxor.u32 %v1931, 2147483648
        %v1933 = vsel %vm1812, %v1932, %v1931
        %v1934 = vsub.s32 4, %v1910
        %v1935 = vsel %vm1812, %v1934, %v1910
        %v1936 = vsel %vm1811, %v254, %v1933
        %v1937 = vsel %vm1811, 0, %v1935
        %v1938 = vmul.f32 %v1936, %v1936
        %v1939 = vmul.f32 %v1938, -0.001358992
        %v1940 = vadd.f32 %v1939, 0.041655596
        %v1941 = vmul.f32 %v1938, %v1940
        %v1942 = vadd.f32 %v1941, -0.4999988
        %v1943 = vmul.f32 %v1938, %v1942
        %v1944 = vadd.f32 1.0, %v1943
        %v1945 = vmul.f32 %v1936, %v1936
        %v1946 = vmul.f32 %v1945, -0.00019511016
        %v1947 = vadd.f32 %v1946, 0.008332121
        %v1948 = vmul.f32 %v1945, %v1947
        %v1949 = vadd.f32 %v1948, -0.16666654
        %v1950 = vmul.f32 %v1945, %v1949
        %v1951 = vadd.f32 %v1950, 1.0
        %v1952 = vmul.f32 %v1951, %v1936
        %vm1953 = vweird.f32 %v254
        %v1954 = vadd.s32 %v1937, 3
        %v1955 = vand.u32 %v1954, 3
        %vm1956 = vcmp.lt.s32.totalorder %v1955, 2
        %vm1957 = vcmp.eq.s32.totalorder %v1955, 0
        %v1958 = vxor.u32 %v1952, 2147483648
        %v1959 = vsel %vm1957, %v1944, %v1958
        %vm1960 = vcmp.eq.s32.totalorder %v1955, 2
        %v1961 = vxor.u32 %v1944, 2147483648
        %v1962 = vsel %vm1960, %v1961, %v1952
        %v1963 = vsel %vm1956, %v1959, %v1962
        %v1964 = vsel %vm1953, nan, %v1963
        %v1965 = vand.u32 2147483647, %v255
        %vm1966 = vcmp.le.f32.partialorder %v1965, 0.7853982
        %vm1967 = vcmp.lt.s32.totalorder %v255, 0
        %v1968 = vand.u32 %v255, 2139095040
        %v1969 = vshrl.u32 %v1968, 23
        %v1970 = vsub.s32 %v1969, 127
        %v1971 = vand.u32 2147483647, %v255
        %v1972 = vand.u32 %v1971, 8388607
        %v1973 = vor.u32 %v1972, 8388608
        %v1974 = vsub.s32 0, %v1973
        %v1975 = vadd.s32 %v1970, 1
        %vm1976 = vcmp.gt.s32.totalorder %v1975, 0
        %v1977 = vsel %vm1976, %v1975, 0
        %v1978 = vshrl.u32 %v1977, 5
        %v1979 = vand.u32 %v1977, 31
        %v1980 = vsub.s32 32, %v1979
        %v1981 = vshrl.u32 683565275, %v1980
        %v1982 = vshll.u32 683565275, %v1979
        %v1983 = vshrl.u32 2475754826, %v1980
        %v1984 = vor.u32 %v1982, %v1983
        %v1985 = vshll.u32 2475754826, %v1979
        %v1986 = vshrl.u32 2131351028, %v1980
        %v1987 = vor.u32 %v1985, %v1986
        %v1988 = vshll.u32 2131351028, %v1979
        %v1989 = vshrl.u32 2102212464, %v1980
        %v1990 = vor.u32 %v1988, %v1989
        %v1991 = vshll.u32 2102212464, %v1979
        %v1992 = vshrl.u32 920167782, %v1980
        %v1993 = vor.u32 %v1991, %v1992
        %v1994 = vshll.u32 920167782, %v1979
        %v1995 = vshrl.u32 1326507024, %v1980
        %v1996 = vor.u32 %v1994, %v1995
        %vm1997 = vcmp.lt.s32.totalorder %v1978, 1
        %vm1998 = vcmp.lt.s32.totalorder %v1978, 2
        %vm1999 = vcmp.lt.s32.totalorder %v1978, 3
        %vm2000 = vcmp.lt.s32.totalorder %v1978, 4
        %v2001 = vsel %vm1997, %v1981, %v1984
        %v2002 = vsel %vm2000, %v1990, 2102212464
        %v2003 = vsel %vm1999, %v1987, %v2002
        %v2004 = vsel %vm1998, %v2001, %v2003
        %v2005 = vsel %vm1997, %v1984, %v1987
        %v2006 = vsel %vm2000, %v1993, 920167782
        %v2007 = vsel %vm1999, %v1990, %v2006
        %v2008 = vsel %vm1998, %v2005, %v2007
        %v2009 = vsel %vm1997, %v1987, %v1990
        %v2010 = vsel %vm2000, %v1996, 1326507024
        %v2011 = vsel %vm1999, %v1993, %v2010
        %v2012 = vsel %vm1998, %v2009, %v2011
        %v2013 = vshll.u32 %v1973, 8
        %v2014 = vand.u32 %v2013, 65535
        %v2015 = vshrl.u32 %v2013, 16
        %v2016 = vand.u32 %v2012, 65535
        %v2017 = vshrl.u32 %v2012, 16
        %v2018 = vmul.u32 %v2014, %v2016
        %v2019 = vmul.u32 %v2014, %v2017
        %v2020 = vmul.u32 %v2015, %v2016
        %v2021 = vmul.u32 %v2015, %v2017
        %v2022 = vshll.u32 %v2019, 16
        %v2023 = vshrl.u32 %v2019, 16
        %v2024 = vshll.u32 %v2020, 16
        %v2025 = vshrl.u32 %v2020, 16
        %vm2026 = vc.u32 %v2018, %v2022
        %v2027 = vsel %vm2026, 1, 0
        %v2028 = vadd.s32 %v2018, %v2022
        %v2029 = vadd.s32 %v2021, %v2027
        %vm2030 = vc.u32 %v2028, %v2024
        %v2031 = vsel %vm2030, 1, 0
        %v2032 = vadd.s32 %v2028, %v2024
        %v2033 = vadd.s32 %v2029, %v2031
        %v2034 = vadd.s32 %v2033, %v2023
        %v2035 = vadd.s32 %v2034, %v2025
        %v2036 = vand.u32 %v2013, 65535
        %v2037 = vshrl.u32 %v2013, 16
        %v2038 = vand.u32 %v2008, 65535
        %v2039 = vshrl.u32 %v2008, 16
        %v2040 = vmul.u32 %v2036, %v2038
        %v2041 = vmul.u32 %v2036, %v2039
        %v2042 = vmul.u32 %v2037, %v2038
        %v2043 = vmul.u32 %v2037, %v2039
        %v2044 = vshll.u32 %v2041, 16
        %v2045 = vshrl.u32 %v2041, 16
        %v2046 = vshll.u32 %v2042, 16
        %v2047 = vshrl.u32 %v2042, 16
        %vm2048 = vc.u32 %v2040, %v2044
        %v2049 = vsel %vm2048, 1, 0
        %v2050 = vadd.s32 %v2040, %v2044
        %v2051 = vadd.s32 %v2043, %v2049
        %vm2052 = vc.u32 %v2050, %v2046
        %v2053 = vsel %vm2052, 1, 0
        %v2054 = vadd.s32 %v2050, %v2046
        %v2055 = vadd.s32 %v2051, %v2053
        %v2056 = vadd.s32 %v2055, %v2045
        %v2057 = vadd.s32 %v2056, %v2047
        %v2058 = vmul.u32 %v2013, %v2004
        %v2059 = vadd.s32 %v2035, %v2054
        %vm2060 = vc.u32 %v2035, %v2054
        %v2061 = vadd.s32 %v2057, 1
        %v2062 = vsel %vm2060, %v2061, %v2057
        %v2063 = vadd.s32 %v2058, %v2062
        %v2064 = vadd.s32 %v2063, 536870912
        %v2065 = vshrl.u32 %v2064, 30
        %v2066 = vshll.u32 %v2065, 30
        %v2067 = vsub.s32 %v2063, %v2066
        %vm2068 = vcmp.lt.s32.totalorder %v2067, 0
        %v2069 = vsub.s32 0, %v2067
        %v2070 = vsel %vm2068, %v2069, %v2067
        %v2071 = vclz %v2070
        %v2072 = vsub.s32 %v2071, 2
        %vm2073 = vcmp.gt.s32.totalorder 0, %v2072
        %v2074 = vsel %vm2073, 0, %v2072
        %v2075 = vsub.s32 32, %v2074
        %v2076 = vshll.u32 %v2067, %v2074
        %v2077 = vshrl.u32 %v2059, %v2075
        %v2078 = vor.u32 %v2076, %v2077
        %v2079 = vsub.s32 4294967266, %v2074
        %v2080 = vadd.s32 %v2079, 127
        %v2081 = vshll.u32 %v2080, 23
        %v2082 = vor.u32 4788187, %v2081
        %v2083 = vand.u32 2147483647, %v2082
        %v2085 = vcvt.s32.f32 %v2078
        %v2086 = vmul.f32 %v2085, %v2083
        %v2087 = vxor.u32 %v2086, 2147483648
        %v2088 = vsel %vm1967, %v2087, %v2086
        %v2089 = vsub.s32 4, %v2065
        %v2090 = vsel %vm1967, %v2089, %v2065
        %v2091 = vsel %vm1966, %v255, %v2088
        %v2092 = vsel %vm1966, 0, %v2090
        %v2093 = vmul.f32 %v2091, %v2091
        %v2094 = vmul.f32 %v2093, -0.001358992
        %v2095 = vadd.f32 %v2094, 0.041655596
        %v2096 = vmul.f32 %v2093, %v2095
        %v2097 = vadd.f32 %v2096, -0.4999988
        %v2098 = vmul.f32 %v2093, %v2097
        %v2099 = vadd.f32 1.0, %v2098
        %v2100 = vmul.f32 %v2091, %v2091
        %v2101 = vmul.f32 %v2100, -0.00019511016
        %v2102 = vadd.f32 %v2101, 0.008332121
        %v2103 = vmul.f32 %v2100, %v2102
        %v2104 = vadd.f32 %v2103, -0.16666654
        %v2105 = vmul.f32 %v2100, %v2104
        %v2106 = vadd.f32 %v2105, 1.0
        %v2107 = vmul.f32 %v2106, %v2091
        %vm2108 = vweird.f32 %v255
        %v2109 = vadd.s32 %v2092, 3
        %v2110 = vand.u32 %v2109, 3
        %vm2111 = vcmp.lt.s32.totalorder %v2110, 2
        %vm2112 = vcmp.eq.s32.totalorder %v2110, 0
        %v2113 = vxor.u32 %v2107, 2147483648
        %v2114 = vsel %vm2112, %v2099, %v2113
        %vm2115 = vcmp.eq.s32.totalorder %v2110, 2
        %v2116 = vxor.u32 %v2099, 2147483648
        %v2117 = vsel %vm2115, %v2116, %v2107
        %v2118 = vsel %vm2111, %v2114, %v2117
        %v2119 = vsel %vm2108, nan, %v2118
        %v2120 = vand.u32 2147483647, %v256
        %vm2121 = vcmp.le.f32.partialorder %v2120, 0.7853982
        %vm2122 = vcmp.lt.s32.totalorder %v256, 0
        %v2123 = vand.u32 %v256, 2139095040
        %v2124 = vshrl.u32 %v2123, 23
        %v2125 = vsub.s32 %v2124, 127
        %v2126 = vand.u32 2147483647, %v256
        %v2127 = vand.u32 %v2126, 8388607
        %v2128 = vor.u32 %v2127, 8388608
        %v2129 = vsub.s32 0, %v2128
        %v2130 = vadd.s32 %v2125, 1
        %vm2131 = vcmp.gt.s32.totalorder %v2130, 0
        %v2132 = vsel %vm2131, %v2130, 0
        %v2133 = vshrl.u32 %v2132, 5
        %v2134 = vand.u32 %v2132, 31
        %v2135 = vsub.s32 32, %v2134
        %v2136 = vshrl.u32 683565275, %v2135
        %v2137 = vshll.u32 683565275, %v2134
        %v2138 = vshrl.u32 2475754826, %v2135
        %v2139 = vor.u32 %v2137, %v2138
        %v2140 = vshll.u32 2475754826, %v2134
        %v2141 = vshrl.u32 2131351028, %v2135
        %v2142 = vor.u32 %v2140, %v2141
        %v2143 = vshll.u32 2131351028, %v2134
        %v2144 = vshrl.u32 2102212464, %v2135
        %v2145 = vor.u32 %v2143, %v2144
        %v2146 = vshll.u32 2102212464, %v2134
        %v2147 = vshrl.u32 920167782, %v2135
        %v2148 = vor.u32 %v2146, %v2147
        %v2149 = vshll.u32 920167782, %v2134
        %v2150 = vshrl.u32 1326507024, %v2135
        %v2151 = vor.u32 %v2149, %v2150
        %vm2152 = vcmp.lt.s32.totalorder %v2133, 1
        %vm2153 = vcmp.lt.s32.totalorder %v2133, 2
        %vm2154 = vcmp.lt.s32.totalorder %v2133, 3
        %vm2155 = vcmp.lt.s32.totalorder %v2133, 4
        %v2156 = vsel %vm2152, %v2136, %v2139
        %v2157 = vsel %vm2155, %v2145, 2102212464
        %v2158 = vsel %vm2154, %v2142, %v2157
        %v2159 = vsel %vm2153, %v2156, %v2158
        %v2160 = vsel %vm2152, %v2139, %v2142
        %v2161 = vsel %vm2155, %v2148, 920167782
        %v2162 = vsel %vm2154, %v2145, %v2161
        %v2163 = vsel %vm2153, %v2160, %v2162
        %v2164 = vsel %vm2152, %v2142, %v2145
        %v2165 = vsel %vm2155, %v2151, 1326507024
        %v2166 = vsel %vm2154, %v2148, %v2165
        %v2167 = vsel %vm2153, %v2164, %v2166
        %v2168 = vshll.u32 %v2128, 8
        %v2169 = vand.u32 %v2168, 65535
        %v2170 = vshrl.u32 %v2168, 16
        %v2171 = vand.u32 %v2167, 65535
        %v2172 = vshrl.u32 %v2167, 16
        %v2173 = vmul.u32 %v2169, %v2171
        %v2174 = vmul.u32 %v2169, %v2172
        %v2175 = vmul.u32 %v2170, %v2171
        %v2176 = vmul.u32 %v2170, %v2172
        %v2177 = vshll.u32 %v2174, 16
        %v2178 = vshrl.u32 %v2174, 16
        %v2179 = vshll.u32 %v2175, 16
        %v2180 = vshrl.u32 %v2175, 16
        %vm2181 = vc.u32 %v2173, %v2177
        %v2182 = vsel %vm2181, 1, 0
        %v2183 = vadd.s32 %v2173, %v2177
        %v2184 = vadd.s32 %v2176, %v2182
        %vm2185 = vc.u32 %v2183, %v2179
        %v2186 = vsel %vm2185, 1, 0
        %v2187 = vadd.s32 %v2183, %v2179
        %v2188 = vadd.s32 %v2184, %v2186
        %v2189 = vadd.s32 %v2188, %v2178
        %v2190 = vadd.s32 %v2189, %v2180
        %v2191 = vand.u32 %v2168, 65535
        %v2192 = vshrl.u32 %v2168, 16
        %v2193 = vand.u32 %v2163, 65535
        %v2194 = vshrl.u32 %v2163, 16
        %v2195 = vmul.u32 %v2191, %v2193
        %v2196 = vmul.u32 %v2191, %v2194
        %v2197 = vmul.u32 %v2192, %v2193
        %v2198 = vmul.u32 %v2192, %v2194
        %v2199 = vshll.u32 %v2196, 16
        %v2200 = vshrl.u32 %v2196, 16
        %v2201 = vshll.u32 %v2197, 16
        %v2202 = vshrl.u32 %v2197, 16
        %vm2203 = vc.u32 %v2195, %v2199
        %v2204 = vsel %vm2203, 1, 0
        %v2205 = vadd.s32 %v2195, %v2199
        %v2206 = vadd.s32 %v2198, %v2204
        %vm2207 = vc.u32 %v2205, %v2201
        %v2208 = vsel %vm2207, 1, 0
        %v2209 = vadd.s32 %v2205, %v2201
        %v2210 = vadd.s32 %v2206, %v2208
        %v2211 = vadd.s32 %v2210, %v2200
        %v2212 = vadd.s32 %v2211, %v2202
        %v2213 = vmul.u32 %v2168, %v2159
        %v2214 = vadd.s32 %v2190, %v2209
        %vm2215 = vc.u32 %v2190, %v2209
        %v2216 = vadd.s32 %v2212, 1
        %v2217 = vsel %vm2215, %v2216, %v2212
        %v2218 = vadd.s32 %v2213, %v2217
        %v2219 = vadd.s32 %v2218, 536870912
        %v2220 = vshrl.u32 %v2219, 30
        %v2221 = vshll.u32 %v2220, 30
        %v2222 = vsub.s32 %v2218, %v2221
        %vm2223 = vcmp.lt.s32.totalorder %v2222, 0
        %v2224 = vsub.s32 0, %v2222
        %v2225 = vsel %vm2223, %v2224, %v2222
        %v2226 = vclz %v2225
        %v2227 = vsub.s32 %v2226, 2
        %vm2228 = vcmp.gt.s32.totalorder 0, %v2227
        %v2229 = vsel %vm2228, 0, %v2227
        %v2230 = vsub.s32 32, %v2229
        %v2231 = vshll.u32 %v2222, %v2229
        %v2232 = vshrl.u32 %v2214, %v2230
        %v2233 = vor.u32 %v2231, %v2232
        %v2234 = vsub.s32 4294967266, %v2229
        %v2235 = vadd.s32 %v2234, 127
        %v2236 = vshll.u32 %v2235, 23
        %v2237 = vor.u32 4788187, %v2236
        %v2238 = vand.u32 2147483647, %v2237
        %v2240 = vcvt.s32.f32 %v2233
        %v2241 = vmul.f32 %v2240, %v2238
        %v2242 = vxor.u32 %v2241, 2147483648
        %v2243 = vsel %vm2122, %v2242, %v2241
        %v2244 = vsub.s32 4, %v2220
        %v2245 = vsel %vm2122, %v2244, %v2220
        %v2246 = vsel %vm2121, %v256, %v2243
        %v2247 = vsel %vm2121, 0, %v2245
        %v2248 = vmul.f32 %v2246, %v2246
        %v2249 = vmul.f32 %v2248, -0.001358992
        %v2250 = vadd.f32 %v2249, 0.041655596
        %v2251 = vmul.f32 %v2248, %v2250
        %v2252 = vadd.f32 %v2251, -0.4999988
        %v2253 = vmul.f32 %v2248, %v2252
        %v2254 = vadd.f32 1.0, %v2253
        %v2255 = vmul.f32 %v2246, %v2246
        %v2256 = vmul.f32 %v2255, -0.00019511016
        %v2257 = vadd.f32 %v2256, 0.008332121
        %v2258 = vmul.f32 %v2255, %v2257
        %v2259 = vadd.f32 %v2258, -0.16666654
        %v2260 = vmul.f32 %v2255, %v2259
        %v2261 = vadd.f32 %v2260, 1.0
        %v2262 = vmul.f32 %v2261, %v2246
        %vm2263 = vweird.f32 %v256
        %v2264 = vadd.s32 %v2247, 3
        %v2265 = vand.u32 %v2264, 3
        %vm2266 = vcmp.lt.s32.totalorder %v2265, 2
        %vm2267 = vcmp.eq.s32.totalorder %v2265, 0
        %v2268 = vxor.u32 %v2262, 2147483648
        %v2269 = vsel %vm2267, %v2254, %v2268
        %vm2270 = vcmp.eq.s32.totalorder %v2265, 2
        %v2271 = vxor.u32 %v2254, 2147483648
        %v2272 = vsel %vm2270, %v2271, %v2262
        %v2273 = vsel %vm2266, %v2269, %v2272
        %v2274 = vsel %vm2263, nan, %v2273
        %v2275 = vand.u32 2147483647, %v257
        %vm2276 = vcmp.le.f32.partialorder %v2275, 0.7853982
        %vm2277 = vcmp.lt.s32.totalorder %v257, 0
        %v2278 = vand.u32 %v257, 2139095040
        %v2279 = vshrl.u32 %v2278, 23
        %v2280 = vsub.s32 %v2279, 127
        %v2281 = vand.u32 2147483647, %v257
        %v2282 = vand.u32 %v2281, 8388607
        %v2283 = vor.u32 %v2282, 8388608
        %v2284 = vsub.s32 0, %v2283
        %v2285 = vadd.s32 %v2280, 1
        %vm2286 = vcmp.gt.s32.totalorder %v2285, 0
        %v2287 = vsel %vm2286, %v2285, 0
        %v2288 = vshrl.u32 %v2287, 5
        %v2289 = vand.u32 %v2287, 31
        %v2290 = vsub.s32 32, %v2289
        %v2291 = vshrl.u32 683565275, %v2290
        %v2292 = vshll.u32 683565275, %v2289
        %v2293 = vshrl.u32 2475754826, %v2290
        %v2294 = vor.u32 %v2292, %v2293
        %v2295 = vshll.u32 2475754826, %v2289
        %v2296 = vshrl.u32 2131351028, %v2290
        %v2297 = vor.u32 %v2295, %v2296
        %v2298 = vshll.u32 2131351028, %v2289
        %v2299 = vshrl.u32 2102212464, %v2290
        %v2300 = vor.u32 %v2298, %v2299
        %v2301 = vshll.u32 2102212464, %v2289
        %v2302 = vshrl.u32 920167782, %v2290
        %v2303 = vor.u32 %v2301, %v2302
        %v2304 = vshll.u32 920167782, %v2289
        %v2305 = vshrl.u32 1326507024, %v2290
        %v2306 = vor.u32 %v2304, %v2305
        %vm2307 = vcmp.lt.s32.totalorder %v2288, 1
        %vm2308 = vcmp.lt.s32.totalorder %v2288, 2
        %vm2309 = vcmp.lt.s32.totalorder %v2288, 3
        %vm2310 = vcmp.lt.s32.totalorder %v2288, 4
        %v2311 = vsel %vm2307, %v2291, %v2294
        %v2312 = vsel %vm2310, %v2300, 2102212464
        %v2313 = vsel %vm2309, %v2297, %v2312
        %v2314 = vsel %vm2308, %v2311, %v2313
        %v2315 = vsel %vm2307, %v2294, %v2297
        %v2316 = vsel %vm2310, %v2303, 920167782
        %v2317 = vsel %vm2309, %v2300, %v2316
        %v2318 = vsel %vm2308, %v2315, %v2317
        %v2319 = vsel %vm2307, %v2297, %v2300
        %v2320 = vsel %vm2310, %v2306, 1326507024
        %v2321 = vsel %vm2309, %v2303, %v2320
        %v2322 = vsel %vm2308, %v2319, %v2321
        %v2323 = vshll.u32 %v2283, 8
        %v2324 = vand.u32 %v2323, 65535
        %v2325 = vshrl.u32 %v2323, 16
        %v2326 = vand.u32 %v2322, 65535
        %v2327 = vshrl.u32 %v2322, 16
        %v2328 = vmul.u32 %v2324, %v2326
        %v2329 = vmul.u32 %v2324, %v2327
        %v2330 = vmul.u32 %v2325, %v2326
        %v2331 = vmul.u32 %v2325, %v2327
        %v2332 = vshll.u32 %v2329, 16
        %v2333 = vshrl.u32 %v2329, 16
        %v2334 = vshll.u32 %v2330, 16
        %v2335 = vshrl.u32 %v2330, 16
        %vm2336 = vc.u32 %v2328, %v2332
        %v2337 = vsel %vm2336, 1, 0
        %v2338 = vadd.s32 %v2328, %v2332
        %v2339 = vadd.s32 %v2331, %v2337
        %vm2340 = vc.u32 %v2338, %v2334
        %v2341 = vsel %vm2340, 1, 0
        %v2342 = vadd.s32 %v2338, %v2334
        %v2343 = vadd.s32 %v2339, %v2341
        %v2344 = vadd.s32 %v2343, %v2333
        %v2345 = vadd.s32 %v2344, %v2335
        %v2346 = vand.u32 %v2323, 65535
        %v2347 = vshrl.u32 %v2323, 16
        %v2348 = vand.u32 %v2318, 65535
        %v2349 = vshrl.u32 %v2318, 16
        %v2350 = vmul.u32 %v2346, %v2348
        %v2351 = vmul.u32 %v2346, %v2349
        %v2352 = vmul.u32 %v2347, %v2348
        %v2353 = vmul.u32 %v2347, %v2349
        %v2354 = vshll.u32 %v2351, 16
        %v2355 = vshrl.u32 %v2351, 16
        %v2356 = vshll.u32 %v2352, 16
        %v2357 = vshrl.u32 %v2352, 16
        %vm2358 = vc.u32 %v2350, %v2354
        %v2359 = vsel %vm2358, 1, 0
        %v2360 = vadd.s32 %v2350, %v2354
        %v2361 = vadd.s32 %v2353, %v2359
        %vm2362 = vc.u32 %v2360, %v2356
        %v2363 = vsel %vm2362, 1, 0
        %v2364 = vadd.s32 %v2360, %v2356
        %v2365 = vadd.s32 %v2361, %v2363
        %v2366 = vadd.s32 %v2365, %v2355
        %v2367 = vadd.s32 %v2366, %v2357
        %v2368 = vmul.u32 %v2323, %v2314
        %v2369 = vadd.s32 %v2345, %v2364
        %vm2370 = vc.u32 %v2345, %v2364
        %v2371 = vadd.s32 %v2367, 1
        %v2372 = vsel %vm2370, %v2371, %v2367
        %v2373 = vadd.s32 %v2368, %v2372
        %v2374 = vadd.s32 %v2373, 536870912
        %v2375 = vshrl.u32 %v2374, 30
        %v2376 = vshll.u32 %v2375, 30
        %v2377 = vsub.s32 %v2373, %v2376
        %vm2378 = vcmp.lt.s32.totalorder %v2377, 0
        %v2379 = vsub.s32 0, %v2377
        %v2380 = vsel %vm2378, %v2379, %v2377
        %v2381 = vclz %v2380
        %v2382 = vsub.s32 %v2381, 2
        %vm2383 = vcmp.gt.s32.totalorder 0, %v2382
        %v2384 = vsel %vm2383, 0, %v2382
        %v2385 = vsub.s32 32, %v2384
        %v2386 = vshll.u32 %v2377, %v2384
        %v2387 = vshrl.u32 %v2369, %v2385
        %v2388 = vor.u32 %v2386, %v2387
        %v2389 = vsub.s32 4294967266, %v2384
        %v2390 = vadd.s32 %v2389, 127
        %v2391 = vshll.u32 %v2390, 23
        %v2392 = vor.u32 4788187, %v2391
        %v2393 = vand.u32 2147483647, %v2392
        %v2395 = vcvt.s32.f32 %v2388
        %v2396 = vmul.f32 %v2395, %v2393
        %v2397 = vxor.u32 %v2396, 2147483648
        %v2398 = vsel %vm2277, %v2397, %v2396
        %v2399 = vsub.s32 4, %v2375
        %v2400 = vsel %vm2277, %v2399, %v2375
        %v2401 = vsel %vm2276, %v257, %v2398
        %v2402 = vsel %vm2276, 0, %v2400
        %v2403 = vmul.f32 %v2401, %v2401
        %v2404 = vmul.f32 %v2403, -0.001358992
        %v2405 = vadd.f32 %v2404, 0.041655596
        %v2406 = vmul.f32 %v2403, %v2405
        %v2407 = vadd.f32 %v2406, -0.4999988
        %v2408 = vmul.f32 %v2403, %v2407
        %v2409 = vadd.f32 1.0, %v2408
        %v2410 = vmul.f32 %v2401, %v2401
        %v2411 = vmul.f32 %v2410, -0.00019511016
        %v2412 = vadd.f32 %v2411, 0.008332121
        %v2413 = vmul.f32 %v2410, %v2412
        %v2414 = vadd.f32 %v2413, -0.16666654
        %v2415 = vmul.f32 %v2410, %v2414
        %v2416 = vadd.f32 %v2415, 1.0
        %v2417 = vmul.f32 %v2416, %v2401
        %vm2418 = vweird.f32 %v257
        %v2419 = vadd.s32 %v2402, 3
        %v2420 = vand.u32 %v2419, 3
        %vm2421 = vcmp.lt.s32.totalorder %v2420, 2
        %vm2422 = vcmp.eq.s32.totalorder %v2420, 0
        %v2423 = vxor.u32 %v2417, 2147483648
        %v2424 = vsel %vm2422, %v2409, %v2423
        %vm2425 = vcmp.eq.s32.totalorder %v2420, 2
        %v2426 = vxor.u32 %v2409, 2147483648
        %v2427 = vsel %vm2425, %v2426, %v2417
        %v2428 = vsel %vm2421, %v2424, %v2427
        %v2429 = vsel %vm2418, nan, %v2428
        %v2430 = vand.u32 2147483647, %v258
        %vm2431 = vcmp.le.f32.partialorder %v2430, 0.7853982
        %vm2432 = vcmp.lt.s32.totalorder %v258, 0
        %v2433 = vand.u32 %v258, 2139095040
        %v2434 = vshrl.u32 %v2433, 23
        %v2435 = vsub.s32 %v2434, 127
        %v2436 = vand.u32 2147483647, %v258
        %v2437 = vand.u32 %v2436, 8388607
        %v2438 = vor.u32 %v2437, 8388608
        %v2439 = vsub.s32 0, %v2438
        %v2440 = vadd.s32 %v2435, 1
        %vm2441 = vcmp.gt.s32.totalorder %v2440, 0
        %v2442 = vsel %vm2441, %v2440, 0
        %v2443 = vshrl.u32 %v2442, 5
        %v2444 = vand.u32 %v2442, 31
        %v2445 = vsub.s32 32, %v2444
        %v2446 = vshrl.u32 683565275, %v2445
        %v2447 = vshll.u32 683565275, %v2444
        %v2448 = vshrl.u32 2475754826, %v2445
        %v2449 = vor.u32 %v2447, %v2448
        %v2450 = vshll.u32 2475754826, %v2444
        %v2451 = vshrl.u32 2131351028, %v2445
        %v2452 = vor.u32 %v2450, %v2451
        %v2453 = vshll.u32 2131351028, %v2444
        %v2454 = vshrl.u32 2102212464, %v2445
        %v2455 = vor.u32 %v2453, %v2454
        %v2456 = vshll.u32 2102212464, %v2444
        %v2457 = vshrl.u32 920167782, %v2445
        %v2458 = vor.u32 %v2456, %v2457
        %v2459 = vshll.u32 920167782, %v2444
        %v2460 = vshrl.u32 1326507024, %v2445
        %v2461 = vor.u32 %v2459, %v2460
        %vm2462 = vcmp.lt.s32.totalorder %v2443, 1
        %vm2463 = vcmp.lt.s32.totalorder %v2443, 2
        %vm2464 = vcmp.lt.s32.totalorder %v2443, 3
        %vm2465 = vcmp.lt.s32.totalorder %v2443, 4
        %v2466 = vsel %vm2462, %v2446, %v2449
        %v2467 = vsel %vm2465, %v2455, 2102212464
        %v2468 = vsel %vm2464, %v2452, %v2467
        %v2469 = vsel %vm2463, %v2466, %v2468
        %v2470 = vsel %vm2462, %v2449, %v2452
        %v2471 = vsel %vm2465, %v2458, 920167782
        %v2472 = vsel %vm2464, %v2455, %v2471
        %v2473 = vsel %vm2463, %v2470, %v2472
        %v2474 = vsel %vm2462, %v2452, %v2455
        %v2475 = vsel %vm2465, %v2461, 1326507024
        %v2476 = vsel %vm2464, %v2458, %v2475
        %v2477 = vsel %vm2463, %v2474, %v2476
        %v2478 = vshll.u32 %v2438, 8
        %v2479 = vand.u32 %v2478, 65535
        %v2480 = vshrl.u32 %v2478, 16
        %v2481 = vand.u32 %v2477, 65535
        %v2482 = vshrl.u32 %v2477, 16
        %v2483 = vmul.u32 %v2479, %v2481
        %v2484 = vmul.u32 %v2479, %v2482
        %v2485 = vmul.u32 %v2480, %v2481
        %v2486 = vmul.u32 %v2480, %v2482
        %v2487 = vshll.u32 %v2484, 16
        %v2488 = vshrl.u32 %v2484, 16
        %v2489 = vshll.u32 %v2485, 16
        %v2490 = vshrl.u32 %v2485, 16
        %vm2491 = vc.u32 %v2483, %v2487
        %v2492 = vsel %vm2491, 1, 0
        %v2493 = vadd.s32 %v2483, %v2487
        %v2494 = vadd.s32 %v2486, %v2492
        %vm2495 = vc.u32 %v2493, %v2489
        %v2496 = vsel %vm2495, 1, 0
        %v2497 = vadd.s32 %v2493, %v2489
        %v2498 = vadd.s32 %v2494, %v2496
        %v2499 = vadd.s32 %v2498, %v2488
        %v2500 = vadd.s32 %v2499, %v2490
        %v2501 = vand.u32 %v2478, 65535
        %v2502 = vshrl.u32 %v2478, 16
        %v2503 = vand.u32 %v2473, 65535
        %v2504 = vshrl.u32 %v2473, 16
        %v2505 = vmul.u32 %v2501, %v2503
        %v2506 = vmul.u32 %v2501, %v2504
        %v2507 = vmul.u32 %v2502, %v2503
        %v2508 = vmul.u32 %v2502, %v2504
        %v2509 = vshll.u32 %v2506, 16
        %v2510 = vshrl.u32 %v2506, 16
        %v2511 = vshll.u32 %v2507, 16
        %v2512 = vshrl.u32 %v2507, 16
        %vm2513 = vc.u32 %v2505, %v2509
        %v2514 = vsel %vm2513, 1, 0
        %v2515 = vadd.s32 %v2505, %v2509
        %v2516 = vadd.s32 %v2508, %v2514
        %vm2517 = vc.u32 %v2515, %v2511
        %v2518 = vsel %vm2517, 1, 0
        %v2519 = vadd.s32 %v2515, %v2511
        %v2520 = vadd.s32 %v2516, %v2518
        %v2521 = vadd.s32 %v2520, %v2510
        %v2522 = vadd.s32 %v2521, %v2512
        %v2523 = vmul.u32 %v2478, %v2469
        %v2524 = vadd.s32 %v2500, %v2519
        %vm2525 = vc.u32 %v2500, %v2519
        %v2526 = vadd.s32 %v2522, 1
        %v2527 = vsel %vm2525, %v2526, %v2522
        %v2528 = vadd.s32 %v2523, %v2527
        %v2529 = vadd.s32 %v2528, 536870912
        %v2530 = vshrl.u32 %v2529, 30
        %v2531 = vshll.u32 %v2530, 30
        %v2532 = vsub.s32 %v2528, %v2531
        %vm2533 = vcmp.lt.s32.totalorder %v2532, 0
        %v2534 = vsub.s32 0, %v2532
        %v2535 = vsel %vm2533, %v2534, %v2532
        %v2536 = vclz %v2535
        %v2537 = vsub.s32 %v2536, 2
        %vm2538 = vcmp.gt.s32.totalorder 0, %v2537
        %v2539 = vsel %vm2538, 0, %v2537
        %v2540 = vsub.s32 32, %v2539
        %v2541 = vshll.u32 %v2532, %v2539
        %v2542 = vshrl.u32 %v2524, %v2540
        %v2543 = vor.u32 %v2541, %v2542
        %v2544 = vsub.s32 4294967266, %v2539
        %v2545 = vadd.s32 %v2544, 127
        %v2546 = vshll.u32 %v2545, 23
        %v2547 = vor.u32 4788187, %v2546
        %v2548 = vand.u32 2147483647, %v2547
        %v2550 = vcvt.s32.f32 %v2543
        %v2551 = vmul.f32 %v2550, %v2548
        %v2552 = vxor.u32 %v2551, 2147483648
        %v2553 = vsel %vm2432, %v2552, %v2551
        %v2554 = vsub.s32 4, %v2530
        %v2555 = vsel %vm2432, %v2554, %v2530
        %v2556 = vsel %vm2431, %v258, %v2553
        %v2557 = vsel %vm2431, 0, %v2555
        %v2558 = vmul.f32 %v2556, %v2556
        %v2559 = vmul.f32 %v2558, -0.001358992
        %v2560 = vadd.f32 %v2559, 0.041655596
        %v2561 = vmul.f32 %v2558, %v2560
        %v2562 = vadd.f32 %v2561, -0.4999988
        %v2563 = vmul.f32 %v2558, %v2562
        %v2564 = vadd.f32 1.0, %v2563
        %v2565 = vmul.f32 %v2556, %v2556
        %v2566 = vmul.f32 %v2565, -0.00019511016
        %v2567 = vadd.f32 %v2566, 0.008332121
        %v2568 = vmul.f32 %v2565, %v2567
        %v2569 = vadd.f32 %v2568, -0.16666654
        %v2570 = vmul.f32 %v2565, %v2569
        %v2571 = vadd.f32 %v2570, 1.0
        %v2572 = vmul.f32 %v2571, %v2556
        %vm2573 = vweird.f32 %v258
        %v2574 = vadd.s32 %v2557, 3
        %v2575 = vand.u32 %v2574, 3
        %vm2576 = vcmp.lt.s32.totalorder %v2575, 2
        %vm2577 = vcmp.eq.s32.totalorder %v2575, 0
        %v2578 = vxor.u32 %v2572, 2147483648
        %v2579 = vsel %vm2577, %v2564, %v2578
        %vm2580 = vcmp.eq.s32.totalorder %v2575, 2
        %v2581 = vxor.u32 %v2564, 2147483648
        %v2582 = vsel %vm2580, %v2581, %v2572
        %v2583 = vsel %vm2576, %v2579, %v2582
        %v2584 = vsel %vm2573, nan, %v2583
        %v2585 = vand.u32 2147483647, %v259
        %vm2586 = vcmp.le.f32.partialorder %v2585, 0.7853982
        %vm2587 = vcmp.lt.s32.totalorder %v259, 0
        %v2588 = vand.u32 %v259, 2139095040
        %v2589 = vshrl.u32 %v2588, 23
        %v2590 = vsub.s32 %v2589, 127
        %v2591 = vand.u32 2147483647, %v259
        %v2592 = vand.u32 %v2591, 8388607
        %v2593 = vor.u32 %v2592, 8388608
        %v2594 = vsub.s32 0, %v2593
        %v2595 = vadd.s32 %v2590, 1
        %vm2596 = vcmp.gt.s32.totalorder %v2595, 0
        %v2597 = vsel %vm2596, %v2595, 0
        %v2598 = vshrl.u32 %v2597, 5
        %v2599 = vand.u32 %v2597, 31
        %v2600 = vsub.s32 32, %v2599
        %v2601 = vshrl.u32 683565275, %v2600
        %v2602 = vshll.u32 683565275, %v2599
        %v2603 = vshrl.u32 2475754826, %v2600
        %v2604 = vor.u32 %v2602, %v2603
        %v2605 = vshll.u32 2475754826, %v2599
        %v2606 = vshrl.u32 2131351028, %v2600
        %v2607 = vor.u32 %v2605, %v2606
        %v2608 = vshll.u32 2131351028, %v2599
        %v2609 = vshrl.u32 2102212464, %v2600
        %v2610 = vor.u32 %v2608, %v2609
        %v2611 = vshll.u32 2102212464, %v2599
        %v2612 = vshrl.u32 920167782, %v2600
        %v2613 = vor.u32 %v2611, %v2612
        %v2614 = vshll.u32 920167782, %v2599
        %v2615 = vshrl.u32 1326507024, %v2600
        %v2616 = vor.u32 %v2614, %v2615
        %vm2617 = vcmp.lt.s32.totalorder %v2598, 1
        %vm2618 = vcmp.lt.s32.totalorder %v2598, 2
        %vm2619 = vcmp.lt.s32.totalorder %v2598, 3
        %vm2620 = vcmp.lt.s32.totalorder %v2598, 4
        %v2621 = vsel %vm2617, %v2601, %v2604
        %v2622 = vsel %vm2620, %v2610, 2102212464
        %v2623 = vsel %vm2619, %v2607, %v2622
        %v2624 = vsel %vm2618, %v2621, %v2623
        %v2625 = vsel %vm2617, %v2604, %v2607
        %v2626 = vsel %vm2620, %v2613, 920167782
        %v2627 = vsel %vm2619, %v2610, %v2626
        %v2628 = vsel %vm2618, %v2625, %v2627
        %v2629 = vsel %vm2617, %v2607, %v2610
        %v2630 = vsel %vm2620, %v2616, 1326507024
        %v2631 = vsel %vm2619, %v2613, %v2630
        %v2632 = vsel %vm2618, %v2629, %v2631
        %v2633 = vshll.u32 %v2593, 8
        %v2634 = vand.u32 %v2633, 65535
        %v2635 = vshrl.u32 %v2633, 16
        %v2636 = vand.u32 %v2632, 65535
        %v2637 = vshrl.u32 %v2632, 16
        %v2638 = vmul.u32 %v2634, %v2636
        %v2639 = vmul.u32 %v2634, %v2637
        %v2640 = vmul.u32 %v2635, %v2636
        %v2641 = vmul.u32 %v2635, %v2637
        %v2642 = vshll.u32 %v2639, 16
        %v2643 = vshrl.u32 %v2639, 16
        %v2644 = vshll.u32 %v2640, 16
        %v2645 = vshrl.u32 %v2640, 16
        %vm2646 = vc.u32 %v2638, %v2642
        %v2647 = vsel %vm2646, 1, 0
        %v2648 = vadd.s32 %v2638, %v2642
        %v2649 = vadd.s32 %v2641, %v2647
        %vm2650 = vc.u32 %v2648, %v2644
        %v2651 = vsel %vm2650, 1, 0
        %v2652 = vadd.s32 %v2648, %v2644
        %v2653 = vadd.s32 %v2649, %v2651
        %v2654 = vadd.s32 %v2653, %v2643
        %v2655 = vadd.s32 %v2654, %v2645
        %v2656 = vand.u32 %v2633, 65535
        %v2657 = vshrl.u32 %v2633, 16
        %v2658 = vand.u32 %v2628, 65535
        %v2659 = vshrl.u32 %v2628, 16
        %v2660 = vmul.u32 %v2656, %v2658
        %v2661 = vmul.u32 %v2656, %v2659
        %v2662 = vmul.u32 %v2657, %v2658
        %v2663 = vmul.u32 %v2657, %v2659
        %v2664 = vshll.u32 %v2661, 16
        %v2665 = vshrl.u32 %v2661, 16
        %v2666 = vshll.u32 %v2662, 16
        %v2667 = vshrl.u32 %v2662, 16
        %vm2668 = vc.u32 %v2660, %v2664
        %v2669 = vsel %vm2668, 1, 0
        %v2670 = vadd.s32 %v2660, %v2664
        %v2671 = vadd.s32 %v2663, %v2669
        %vm2672 = vc.u32 %v2670, %v2666
        %v2673 = vsel %vm2672, 1, 0
        %v2674 = vadd.s32 %v2670, %v2666
        %v2675 = vadd.s32 %v2671, %v2673
        %v2676 = vadd.s32 %v2675, %v2665
        %v2677 = vadd.s32 %v2676, %v2667
        %v2678 = vmul.u32 %v2633, %v2624
        %v2679 = vadd.s32 %v2655, %v2674
        %vm2680 = vc.u32 %v2655, %v2674
        %v2681 = vadd.s32 %v2677, 1
        %v2682 = vsel %vm2680, %v2681, %v2677
        %v2683 = vadd.s32 %v2678, %v2682
        %v2684 = vadd.s32 %v2683, 536870912
        %v2685 = vshrl.u32 %v2684, 30
        %v2686 = vshll.u32 %v2685, 30
        %v2687 = vsub.s32 %v2683, %v2686
        %vm2688 = vcmp.lt.s32.totalorder %v2687, 0
        %v2689 = vsub.s32 0, %v2687
        %v2690 = vsel %vm2688, %v2689, %v2687
        %v2691 = vclz %v2690
        %v2692 = vsub.s32 %v2691, 2
        %vm2693 = vcmp.gt.s32.totalorder 0, %v2692
        %v2694 = vsel %vm2693, 0, %v2692
        %v2695 = vsub.s32 32, %v2694
        %v2696 = vshll.u32 %v2687, %v2694
        %v2697 = vshrl.u32 %v2679, %v2695
        %v2698 = vor.u32 %v2696, %v2697
        %v2699 = vsub.s32 4294967266, %v2694
        %v2700 = vadd.s32 %v2699, 127
        %v2701 = vshll.u32 %v2700, 23
        %v2702 = vor.u32 4788187, %v2701
        %v2703 = vand.u32 2147483647, %v2702
        %v2705 = vcvt.s32.f32 %v2698
        %v2706 = vmul.f32 %v2705, %v2703
        %v2707 = vxor.u32 %v2706, 2147483648
        %v2708 = vsel %vm2587, %v2707, %v2706
        %v2709 = vsub.s32 4, %v2685
        %v2710 = vsel %vm2587, %v2709, %v2685
        %v2711 = vsel %vm2586, %v259, %v2708
        %v2712 = vsel %vm2586, 0, %v2710
        %v2713 = vmul.f32 %v2711, %v2711
        %v2714 = vmul.f32 %v2713, -0.001358992
        %v2715 = vadd.f32 %v2714, 0.041655596
        %v2716 = vmul.f32 %v2713, %v2715
        %v2717 = vadd.f32 %v2716, -0.4999988
        %v2718 = vmul.f32 %v2713, %v2717
        %v2719 = vadd.f32 1.0, %v2718
        %v2720 = vmul.f32 %v2711, %v2711
        %v2721 = vmul.f32 %v2720, -0.00019511016
        %v2722 = vadd.f32 %v2721, 0.008332121
        %v2723 = vmul.f32 %v2720, %v2722
        %v2724 = vadd.f32 %v2723, -0.16666654
        %v2725 = vmul.f32 %v2720, %v2724
        %v2726 = vadd.f32 %v2725, 1.0
        %v2727 = vmul.f32 %v2726, %v2711
        %vm2728 = vweird.f32 %v259
        %v2729 = vadd.s32 %v2712, 3
        %v2730 = vand.u32 %v2729, 3
        %vm2731 = vcmp.lt.s32.totalorder %v2730, 2
        %vm2732 = vcmp.eq.s32.totalorder %v2730, 0
        %v2733 = vxor.u32 %v2727, 2147483648
        %v2734 = vsel %vm2732, %v2719, %v2733
        %vm2735 = vcmp.eq.s32.totalorder %v2730, 2
        %v2736 = vxor.u32 %v2719, 2147483648
        %v2737 = vsel %vm2735, %v2736, %v2727
        %v2738 = vsel %vm2731, %v2734, %v2737
        %v2739 = vsel %vm2728, nan, %v2738
        %2740 = vst [vmem:[%s151] sm:$0xff] %v414
        %2741 = vst [vmem:[%s151 + $0x8] sm:$0xff] %v569
        %2742 = vst [vmem:[%s151 + $0x10] sm:$0xff] %v724
        %2743 = vst [vmem:[%s151 + $0x18] sm:$0xff] %v879
        %2744 = vst [vmem:[%s151 + $0x20] sm:$0xff] %v1034
        %2745 = vst [vmem:[%s151 + $0x28] sm:$0xff] %v1189
        %2746 = vst [vmem:[%s151 + $0x30] sm:$0xff] %v1344
        %2747 = vst [vmem:[%s151 + $0x38] sm:$0xff] %v1499
        %2748 = vst [vmem:[%s151 + $0x40] sm:$0xff] %v1654
        %2749 = vst [vmem:[%s151 + $0x48] sm:$0xff] %v1809
        %2750 = vst [vmem:[%s151 + $0x50] sm:$0xff] %v1964
        %2751 = vst [vmem:[%s151 + $0x58] sm:$0xff] %v2119
        %2752 = vst [vmem:[%s151 + $0x60] sm:$0xff] %v2274
        %2753 = vst [vmem:[%s151 + $0x68] sm:$0xff] %v2429
        %2754 = vst [vmem:[%s151 + $0x70] sm:$0xff] %v2584
        %2755 = vst [vmem:[%s151 + $0x78] sm:$0xff] %v2739
        %s2756 = sand.u32 %s68, 1
        %s2757 = scalar_lea.sflag [#allocation4], %s2756
        %s2758 = sand.u32 %s68, 1
        %s2759 = smul.addr %s2758, 128
        %s2760 = scalar_lea.vmem [#allocation7], %s2759
        // Predicated region
        $region37: #{tpu_custom_call.1} parent=27 // pred_check
          %p2761 = pneg %p78
        $region38: #{tpu_custom_call.1} parent=27 // pred_check_branch
          %2763 = sbr.rel (%p2761) target = $region40
        $region39: #{tpu_custom_call.1} parent=27 // pred_region
          %s2764 = smul.u32 16, %s18
          %2766 = vsyncadd %s2757, 0
          %s2767 = smul.addr %s2764, 8
          %s2768 = scalar_lea.hbm %s2, %s2767
          %s2769 = sshll.u32 %s2760, 4
          %s2770 = int_to_ptr.vmem [resolvable:$true] %s2769
          %s2771 = sshll.u32 %s2768, 4
          %s2772 = int_to_ptr.hbm [resolvable:$true] %s2771
          %2777 = dma.vmem_to_hbm [thread:$0]  %s2770, 2048, %s2772, %s2757, 128, 128, 8
        $region40: #{tpu_custom_call.1} parent=27 // pred_fallthru
          _
      $region28: #{tpu_custom_call.1} parent=5 // pred_fallthru
        _
      %p2778 = scmp.le.s32.totalorder 2, %s13
      // Predicated region
      $region41: #{tpu_custom_call.1} parent=5 // pred_check
        %p2779 = pneg %p2778
      $region42: #{tpu_custom_call.1} parent=5 // pred_check_branch
        %2781 = sbr.rel (%p2779) target = $region44
      $region43: #{tpu_custom_call.1} parent=5 // pred_region
        %s2782 = ssub.s32 %s13, 2
        // Predicated region
        $region45: #{tpu_custom_call.1} parent=43 // pred_check
          %p2783 = pneg %p84
        $region46: #{tpu_custom_call.1} parent=43 // pred_check_branch
          %2785 = sbr.rel (%p2783) target = $region48
        $region47: #{tpu_custom_call.1} parent=43 // pred_region
          %s2786 = sand.u32 %s69, 1
          %s2787 = scalar_lea.sflag [#allocation4], %s2786
          %s2788 = sand.u32 %s69, 1
          %s2789 = smul.addr %s2788, 128
          %s2790 = scalar_lea.vmem [#allocation7], %s2789
          %2792 = dma.done %s2787, 2048
        $region48: #{tpu_custom_call.1} parent=43 // pred_fallthru
          _
      $region44: #{tpu_custom_call.1} parent=5 // pred_fallthru
        _
    $region6: #{tpu_custom_call.1} parent=1 // loop_footer
      %s17 = sadd.s32 1, %s13
    $region7: #{tpu_custom_call.1} parent=1 // loop_footer_branch
      %12 = sbr.rel target = $region3
    $region8: #{tpu_custom_call.1} parent=1 // loop_exit
      _
    %2793 = vsyncpa [#allocation3], 1
    %s2794 = scalar_lea.sflag [#allocation3], 1
    %2795 = vsyncpa %s2794, 1
    %2796 = vsyncpa [#allocation6], 1
    %2797 = vsyncpa [#allocation4], 1
    %s2798 = scalar_lea.sflag [#allocation4], 1
    %2799 = vsyncpa %s2798, 1

</llo_original>
